<compile_context>
chip_gen: v6e
topology: v6e:2x2x1
jax: 0.10.0
libtpu: 0.0.40
codegen_flags: <defaults>
</compile_context>

<pallas_src>
import functools
import math

import jax
import jax.numpy as jnp
from jax import lax
from jax.experimental import pallas as pl
from jax.experimental.pallas import tpu as pltpu


# ---------------------------------------------------------------------------
# Fused GEMM Pallas kernel
# ---------------------------------------------------------------------------

def _make_gemm_kernel(use_pro, pro_relu, epi_relu):
    def kernel(a_ref, b_ref, ps_ref, pt_ref, es_ref, et_ref, o_ref):
        a = a_ref[...]                                     # (tm, K) bf16
        if use_pro:                                        # fused BN(+ReLU) prologue
            af = a.astype(jnp.float32) * ps_ref[...] + pt_ref[...]
            if pro_relu:
                af = jnp.maximum(af, 0.0)
            a = af.astype(jnp.bfloat16)
        acc = jnp.dot(a, b_ref[...],                       # MXU bf16, f32 accumulate
                      preferred_element_type=jnp.float32)
        acc = acc * es_ref[...] + et_ref[...]              # fused BN/bias epilogue
        if epi_relu:
            acc = jnp.maximum(acc, 0.0)
        o_ref[...] = acc.astype(o_ref.dtype)
    return kernel


def _round_up(x, m):
    return ((x + m - 1) // m) * m


def _pick_tm(mp):
    """Largest M-tile (multiple of 8, <=512) that divides mp -> no M padding."""
    if mp <= 512:
        return mp
    for t in range(512, 0, -8):
        if mp % t == 0:
            return t
    return 8


@functools.lru_cache(maxsize=None)
def _gemm_callable(mp, kp, n, tm, tn, use_pro, pro_relu, epi_relu, out_dtype):
    kern = _make_gemm_kernel(use_pro, pro_relu, epi_relu)
    fn = pl.pallas_call(
        kern,
        out_shape=jax.ShapeDtypeStruct((mp, n), jnp.dtype(out_dtype)),
        grid=(mp // tm, n // tn),
        in_specs=[
            pl.BlockSpec((tm, kp), lambda i, j: (i, 0)),   # A tile (full K)
            pl.BlockSpec((kp, tn), lambda i, j: (0, j)),   # B tile (full K)
            pl.BlockSpec((1, kp), lambda i, j: (0, 0)),    # prologue scale
            pl.BlockSpec((1, kp), lambda i, j: (0, 0)),    # prologue shift
            pl.BlockSpec((1, tn), lambda i, j: (0, j)),    # epilogue scale
            pl.BlockSpec((1, tn), lambda i, j: (0, j)),    # epilogue shift
        ],
        out_specs=pl.BlockSpec((tm, tn), lambda i, j: (i, j)),
        compiler_params=pltpu.CompilerParams(
            dimension_semantics=("parallel", "parallel")),
    )
    return jax.jit(fn)


def fused_gemm(a, b, *, pro=None, pro_relu=False, epi=None, epi_relu=False,
               out_dtype=jnp.bfloat16):
    """out = epilogue(prologue(a) @ b); a:(M,K), b:(K,N)."""
    M, K = a.shape
    Kb, N = b.shape
    assert K == Kb
    a = a.astype(jnp.bfloat16)
    b = b.astype(jnp.bfloat16)

    kp = _round_up(K, 128)          # zero-pad K (exact: padded B rows are zero)
    mp = _round_up(M, 8)            # pad M only to sublane multiple
    if kp != K:
        a = jnp.pad(a, ((0, 0), (0, kp - K)))
        b = jnp.pad(b, ((0, kp - K), (0, 0)))
    if mp != M:
        a = jnp.pad(a, ((0, mp - M), (0, 0)))
    tm = _pick_tm(mp)
    tn = 256 if (N > 256 and N % 256 == 0) else N

    if pro is not None:
        ps = jnp.pad(pro[0].astype(jnp.float32).reshape(1, K), ((0, 0), (0, kp - K)))
        pt = jnp.pad(pro[1].astype(jnp.float32).reshape(1, K), ((0, 0), (0, kp - K)))
    else:
        ps = jnp.ones((1, kp), jnp.float32)
        pt = jnp.zeros((1, kp), jnp.float32)
    if epi is not None:
        es = epi[0].astype(jnp.float32).reshape(1, N)
        et = epi[1].astype(jnp.float32).reshape(1, N)
    else:
        es = jnp.ones((1, N), jnp.float32)
        et = jnp.zeros((1, N), jnp.float32)

    fn = _gemm_callable(mp, kp, N, tm, tn, pro is not None, bool(pro_relu),
                        bool(epi_relu), jnp.dtype(out_dtype).name)
    out = fn(a, b, ps, pt, es, et)
    return out if mp == M else out[:M]


# ---------------------------------------------------------------------------
# NN building blocks (glue in plain JAX, GEMM hot path in Pallas)
# ---------------------------------------------------------------------------

def bn_vecs(p, eps=1e-5):
    """Inference-mode BatchNorm as a per-channel (scale, shift) pair."""
    inv = p['gamma'] * lax.rsqrt(p['var'] + eps)
    return inv, p['beta'] - p['mean'] * inv


def conv2d(x, w, stride, padding, *, pro=None, pro_relu=False,
           epi=None, epi_relu=False):
    """x: (N,H,W,C) NHWC, w: (kh,kw,Cin,Cout); cross-correlation like nn.Conv2d."""
    kh, kw, cin, cout = w.shape
    n, h, wd, c = x.shape
    assert c == cin
    if kh == 1 and kw == 1 and stride == 1 and padding == 0:
        oh, ow = h, wd
        a = x.reshape(n * h * wd, c)
    else:
        assert pro is None, "per-channel prologue only supported for 1x1 convs"
        xp = jnp.pad(x, ((0, 0), (padding, padding), (padding, padding), (0, 0)))
        oh = (h + 2 * padding - kh) // stride + 1
        ow = (wd + 2 * padding - kw) // stride + 1
        cols = []
        for i in range(kh):
            for j in range(kw):
                cols.append(lax.slice(
                    xp,
                    (0, i, j, 0),
                    (n, i + stride * (oh - 1) + 1, j + stride * (ow - 1) + 1, c),
                    (1, stride, stride, 1)))
        # TODO(synk): im2col patches are still materialized in HBM (bf16);
        # a halo-BlockSpec fused 3x3 conv would remove this remaining copy.
        a = jnp.stack(cols, axis=3).reshape(n * oh * ow, kh * kw * c)
    y = fused_gemm(a, w.reshape(kh * kw * cin, cout),
                   pro=pro, pro_relu=pro_relu, epi=epi, epi_relu=epi_relu)
    return y.reshape(n, oh, ow, cout)


def maxpool_3x3_s2_p1(x):
    # TODO(synk): max-pool window reduction done in plain JAX, not Pallas.
    n, h, w, c = x.shape
    xp = jnp.pad(x, ((0, 0), (1, 1), (1, 1), (0, 0)), constant_values=-jnp.inf)
    oh = (h + 2 - 3) // 2 + 1
    ow = (w + 2 - 3) // 2 + 1
    out = None
    for i in range(3):
        for j in range(3):
            sl = lax.slice(xp, (0, i, j, 0),
                           (n, i + 2 * (oh - 1) + 1, j + 2 * (ow - 1) + 1, c),
                           (1, 2, 2, 1))
            out = sl if out is None else jnp.maximum(out, sl)
    return out


def avg_pool2(x):
    # TODO(synk): 2x2 average pool done as a plain-JAX reshape/mean.
    n, h, w, c = x.shape
    y = x.astype(jnp.float32).reshape(n, h // 2, 2, w // 2, 2, c).mean(axis=(2, 4))
    return y.astype(x.dtype)


def linear(x, p, relu, *, pro=None, pro_relu=False, out_dtype=jnp.bfloat16):
    """nn.Linear(+optional ReLU) as a single fused GEMM (bias in the epilogue)."""
    n_out = p['w'].shape[1]
    return fused_gemm(x, p['w'],
                      pro=pro, pro_relu=pro_relu,
                      epi=(jnp.ones((n_out,), jnp.float32), p['b']),
                      epi_relu=relu, out_dtype=out_dtype)


# ---------------------------------------------------------------------------
# DenseNet-121 feature extractor (torchvision densenet121.features)
# ---------------------------------------------------------------------------

GROWTH = 32
BLOCK_CONFIG = (6, 12, 24, 16)
NUM_INIT_FEATURES = 64
BN_SIZE = 4


def dense_layer(x, p):
    s1, t1 = bn_vecs(p['norm1'])
    s2, t2 = bn_vecs(p['norm2'])
    # norm1+ReLU fused as GEMM prologue, norm2+ReLU fused as GEMM epilogue of
    # the 1x1 bottleneck conv; the 3x3 conv runs as a plain GEMM.
    y = conv2d(x, p['conv1'], stride=1, padding=0,
               pro=(s1, t1), pro_relu=True, epi=(s2, t2), epi_relu=True)
    y = conv2d(y, p['conv2'], stride=1, padding=1)
    # TODO(synk): fuse the concat by writing conv2's 32 channels in place into
    # a preallocated block buffer (removes one full feature-map copy / layer).
    return jnp.concatenate([x, y], axis=-1)


def transition(x, p):
    s, t = bn_vecs(p['norm'])
    y = conv2d(x, p['conv'], stride=1, padding=0, pro=(s, t), pro_relu=True)
    return avg_pool2(y)


def densenet_features(p, x):
    # Fold the 3-identical-channel expand into conv0's weights (sum over Cin),
    # and fuse norm0+ReLU into conv0's GEMM epilogue.
    s0, t0 = bn_vecs(p['norm0'])
    w0 = p['conv0'].sum(axis=2, keepdims=True)            # (7,7,3,64) -> (7,7,1,64)
    x = conv2d(x, w0, stride=2, padding=3, epi=(s0, t0), epi_relu=True)
    x = maxpool_3x3_s2_p1(x)
    for bi, n_layers in enumerate(BLOCK_CONFIG):
        for li in range(n_layers):
            x = dense_layer(x, p[f'block{bi}'][li])
        if bi != len(BLOCK_CONFIG) - 1:
            x = transition(x, p[f'trans{bi}'])
    # NOTE: norm5 (no ReLU) is NOT applied here; it commutes with the spatial
    # mean and is fused into the final_lin GEMM prologue instead.
    return x


# ---------------------------------------------------------------------------
# RevisedDenseNet forward
# ---------------------------------------------------------------------------

def revised_densenet_forward(params, x, num_inputs=2):
    """x: (B, T, H, W) float32 — matches the PyTorch module's (B, T, C, H)."""
    B, T, H, W = x.shape
    assert T == num_inputs
    # transpose(0,1) + per-input loop; weights are shared so we batch T*B.
    # The expand to 3 channels is folded into conv0's weights -> Cin stays 1.
    xt = jnp.transpose(x, (1, 0, 2, 3)).reshape(T * B, H, W, 1).astype(jnp.bfloat16)

    feat = densenet_features(params['features'], xt)         # (T*B, 5, 5, 1024)
    # AvgPool2d(kernel=5) on a 5x5 map -> 1x1 -> flatten to 1024.
    pooled = jnp.mean(feat.astype(jnp.float32), axis=(1, 2))  # (T*B, 1024)
    s5, t5 = bn_vecs(params['features']['norm5'])
    out3 = linear(pooled, params['final_lin'], relu=False,
                  pro=(s5, t5), pro_relu=False)               # (T*B, 256)

    # torch.cat(x_list, 1): per batch element concatenate the T feature vectors.
    comb = out3.reshape(T, B, 256).transpose(1, 0, 2).reshape(B, T * 256)
    h = linear(comb, params['combo'], relu=True)              # Linear + ReLU
    pred = linear(h, params['out'], relu=False, out_dtype=jnp.float32)
    return pred


# ---------------------------------------------------------------------------
# Deterministic parameter initialization (synthetic weights, no checkpoint)
# ---------------------------------------------------------------------------

def _conv_init(key, kh, kw, cin, cout):
    fan_in = kh * kw * cin
    w = jax.random.normal(key, (kh, kw, cin, cout), jnp.float32) * math.sqrt(2.0 / fan_in)
    return w.astype(jnp.bfloat16)            # pre-cast once for the bf16 MXU path


def _bn_init(c):
    # PyTorch BatchNorm2d defaults: weight=1, bias=0, running_mean=0, running_var=1.
    return dict(gamma=jnp.ones((c,), jnp.float32),
                beta=jnp.zeros((c,), jnp.float32),
                mean=jnp.zeros((c,), jnp.float32),
                var=jnp.ones((c,), jnp.float32))


def _lin_init(key, cin, cout):
    k1, k2 = jax.random.split(key)
    w = (jax.random.normal(k1, (cin, cout), jnp.float32) / math.sqrt(cin)).astype(jnp.bfloat16)
    b = jax.random.normal(k2, (cout,), jnp.float32) * 0.01
    return dict(w=w, b=b)


def init_params(key, classes=2, num_inputs=2):
    keys = iter(jax.random.split(key, 512))
    feats = {}
    feats['conv0'] = _conv_init(next(keys), 7, 7, 3, NUM_INIT_FEATURES)
    feats['norm0'] = _bn_init(NUM_INIT_FEATURES)
    c = NUM_INIT_FEATURES
    for bi, n_layers in enumerate(BLOCK_CONFIG):
        layers = []
        for _ in range(n_layers):
            layers.append(dict(
                norm1=_bn_init(c),
                conv1=_conv_init(next(keys), 1, 1, c, BN_SIZE * GROWTH),
                norm2=_bn_init(BN_SIZE * GROWTH),
                conv2=_conv_init(next(keys), 3, 3, BN_SIZE * GROWTH, GROWTH),
            ))
            c += GROWTH
        feats[f'block{bi}'] = layers
        if bi != len(BLOCK_CONFIG) - 1:
            feats[f'trans{bi}'] = dict(norm=_bn_init(c),
                                       conv=_conv_init(next(keys), 1, 1, c, c // 2))
            c //= 2
    feats['norm5'] = _bn_init(c)   # c == 1024
    return dict(
        features=feats,
        final_lin=_lin_init(next(keys), 1024, 256),
        combo=_lin_init(next(keys), num_inputs * 256, 256),
        out=_lin_init(next(keys), 256, classes),
    )


# ---------------------------------------------------------------------------

if __name__ == "__main__":
    classes, num_inputs = 2, 2
    # Smallest spatial size for which DenseNet-121 features (stride 32) give a
    # 5x5 map so that AvgPool2d(5) -> 1x1 and the flatten is exactly 1024 dims.
    B, H, W = 2, 160, 160

    key = jax.random.PRNGKey(0)
    pkey, xkey = jax.random.split(key)
    params = init_params(pkey, classes=classes, num_inputs=num_inputs)
    x = jax.random.normal(xkey, (B, num_inputs, H, W), jnp.float32)

    pred = revised_densenet_forward(params, x, num_inputs=num_inputs)
    pred = jax.block_until_ready(pred)

    assert pred.shape == (B, classes), pred.shape
    assert bool(jnp.all(jnp.isfinite(pred)))
    print("KERNEL_OK")
</pallas_src>

<mosaic_0001>
module attributes {stable_mosaic.version = 11 : i64} {
  func.func @kernel(%arg0: i32, %arg1: i32, %arg2: memref<512x128xbf16, #tpu.memory_space<vmem>>, %arg3: memref<128x64xbf16, #tpu.memory_space<vmem>>, %arg4: memref<1x128xf32, #tpu.memory_space<vmem>>, %arg5: memref<1x128xf32, #tpu.memory_space<vmem>>, %arg6: memref<1x64xf32, #tpu.memory_space<vmem>>, %arg7: memref<1x64xf32, #tpu.memory_space<vmem>>, %arg8: memref<512x64xbf16, #tpu.memory_space<vmem>>) attributes {dimension_semantics = [#tpu.dimension_semantics<parallel>, #tpu.dimension_semantics<parallel>], iteration_bounds = array<i64: 50, 1>, scalar_prefetch = 0 : i64, scratch_operands = 0 : i64, tpu.core_type = #tpu.core_type<tc>, window_params = [{transform_indices = @transform_0, window_bounds = array<i64: 512, 128>}, {transform_indices = @transform_1, window_bounds = array<i64: 128, 64>}, {pipeline_mode = #tpu.pipeline_mode<synchronous>, transform_indices = @transform_2, window_bounds = array<i64: 1, 128>}, {pipeline_mode = #tpu.pipeline_mode<synchronous>, transform_indices = @transform_3, window_bounds = array<i64: 1, 128>}, {transform_indices = @transform_4, window_bounds = array<i64: 1, 64>}, {transform_indices = @transform_5, window_bounds = array<i64: 1, 64>}, {transform_indices = @transform_6, window_bounds = array<i64: 512, 64>}]} {
    %c0 = arith.constant 0 : index
    %c0_0 = arith.constant 0 : index
    %0 = vector.load %arg2[%c0, %c0_0] : memref<512x128xbf16, #tpu.memory_space<vmem>>, vector<512x128xbf16>
    %c0_1 = arith.constant 0 : index
    %c0_2 = arith.constant 0 : index
    %1 = vector.load %arg3[%c0_1, %c0_2] : memref<128x64xbf16, #tpu.memory_space<vmem>>, vector<128x64xbf16>
    %cst = arith.constant dense<0.000000e+00> : vector<512x64xf32>
    %2 = tpu.matmul %0, %1, %cst {dimension_numbers = #tpu.dot_dimension_numbers<[1], [0], [0], [1], [0, 0, 1, 1], [], []>} : vector<512x128xbf16>, vector<128x64xbf16>, vector<512x64xf32> -> vector<512x64xf32>
    %c0_3 = arith.constant 0 : index
    %c0_4 = arith.constant 0 : index
    %3 = vector.load %arg6[%c0_3, %c0_4] : memref<1x64xf32, #tpu.memory_space<vmem>>, vector<1x64xf32>
    %4 = vector.broadcast %3 : vector<1x64xf32> to vector<512x64xf32>
    %5 = arith.mulf %2, %4 : vector<512x64xf32>
    %c0_5 = arith.constant 0 : index
    %c0_6 = arith.constant 0 : index
    %6 = vector.load %arg7[%c0_5, %c0_6] : memref<1x64xf32, #tpu.memory_space<vmem>>, vector<1x64xf32>
    %7 = vector.broadcast %6 : vector<1x64xf32> to vector<512x64xf32>
    %8 = arith.addf %5, %7 : vector<512x64xf32>
    %cst_7 = arith.constant 0.000000e+00 : f32
    %9 = vector.broadcast %cst_7 : f32 to vector<512x64xf32>
    %10 = arith.maximumf %8, %9 : vector<512x64xf32>
    %11 = arith.truncf %10 : vector<512x64xf32> to vector<512x64xbf16>
    %c0_8 = arith.constant 0 : index
    %c0_9 = arith.constant 0 : index
    %12 = vector.load %arg8[%c0_8, %c0_9] : memref<512x64xbf16, #tpu.memory_space<vmem>>, vector<512x64xbf16>
    tpu.vector_store %arg8[%c0_8, %c0_9], %11 {strides = array<i32>} : memref<512x64xbf16, #tpu.memory_space<vmem>>, vector<512x64xbf16>,
    return
  }
  func.func @transform_0(%arg0: i32, %arg1: i32) -> (i32, i32) {
    %c0_i32 = arith.constant 0 : i32
    %c0_i32_0 = arith.constant 0 : i32
    return %arg0, %c0_i32 : i32, i32
  }
  func.func @transform_1(%arg0: i32, %arg1: i32) -> (i32, i32) {
    %c0_i32 = arith.constant 0 : i32
    %c0_i32_0 = arith.constant 0 : i32
    return %c0_i32, %arg1 : i32, i32
  }
  func.func @transform_2(%arg0: i32, %arg1: i32) -> (i32, i32) {
    %c0_i32 = arith.constant 0 : i32
    %c0_i32_0 = arith.constant 0 : i32
    %c0_i32_1 = arith.constant 0 : i32
    return %c0_i32, %c0_i32_0 : i32, i32
  }
  func.func @transform_3(%arg0: i32, %arg1: i32) -> (i32, i32) {
    %c0_i32 = arith.constant 0 : i32
    %c0_i32_0 = arith.constant 0 : i32
    %c0_i32_1 = arith.constant 0 : i32
    return %c0_i32, %c0_i32_0 : i32, i32
  }
  func.func @transform_4(%arg0: i32, %arg1: i32) -> (i32, i32) {
    %c0_i32 = arith.constant 0 : i32
    %c0_i32_0 = arith.constant 0 : i32
    return %c0_i32, %arg1 : i32, i32
  }
  func.func @transform_5(%arg0: i32, %arg1: i32) -> (i32, i32) {
    %c0_i32 = arith.constant 0 : i32
    %c0_i32_0 = arith.constant 0 : i32
    return %c0_i32, %arg1 : i32, i32
  }
  func.func @transform_6(%arg0: i32, %arg1: i32) -> (i32, i32) {
    %c0_i32 = arith.constant 0 : i32
    return %arg0, %arg1 : i32, i32
  }
}

</mosaic_0001>

<llo_original>
// kernel: tpu_custom_call.1
$region0: #{tpu_custom_call.1}
  #allocation0 [shape = 'u32[]', space=smem, size = 0x4, offset = 0x4, fixed_abs, tag = 'smem constant byte address 0x4 - core index']
  #allocation1 [shape = 'u32[144,128]{1,0:T(1,128)}', space=vmem, size = 0x12000, scoped, tag = 'internal scratch']
  %s0 = inlined_call_operand.hbm [shape: bf16[25600,128], index: 0, kind: input, shape index: {}]
  %s1 = inlined_call_operand.vmem [shape: bf16[128,64], index: 1, kind: input, shape index: {}]
  %s2 = inlined_call_operand.hbm [shape: f32[1,128], index: 2, kind: input, shape index: {}]
  %s3 = inlined_call_operand.hbm [shape: f32[1,128], index: 3, kind: input, shape index: {}]
  %s4 = inlined_call_operand.hbm [shape: f32[1,64], index: 4, kind: input, shape index: {}]
  %s5 = inlined_call_operand.hbm [shape: f32[1,64], index: 5, kind: input, shape index: {}]
  %s6 = inlined_call_operand.vmem [shape: bf16[25600,64], index: 6, kind: output, shape index: {}]
  %s7 = sld [smem:[#allocation0]]
  $region77: #{tpu_custom_call.1} parent=0
    _
  %s9 = ssub.s32 1, %s7
  %s10 = scalar_select 0, %s9, %s7
  $region1: #{tpu_custom_call.1} parent=0
    #allocation2 [shape = 'u8[262144]{0}', space=vmem, size = 0x40000, scoped, tag = 'input window, operand 0']
    #allocation3 [shape = 's32[2]{0}', space=sflag, size = 0x8, scoped, tag = 'scoped memory for tpu_custom_call.1']
    #allocation4 [shape = 'u8[512]{0}', space=vmem, size = 0x400, scoped, tag = 'input window, operand 2, single buffered']
    #allocation5 [shape = 's32[1]{0}', space=sflag, size = 0x4, scoped, tag = 'scoped memory for tpu_custom_call.1']
    #allocation6 [shape = 'u8[512]{0}', space=vmem, size = 0x400, scoped, tag = 'input window, operand 3, single buffered']
    #allocation7 [shape = 'u8[512]{0}', space=vmem, size = 0x400, scoped, tag = 'input window, operand 4, single buffered']
    #allocation8 [shape = 's32[1]{0}', space=sflag, size = 0x4, scoped, tag = 'scoped memory for tpu_custom_call.1']
    #allocation9 [shape = 'u8[512]{0}', space=vmem, size = 0x400, scoped, tag = 'input window, operand 5, single buffered']
    %11 = vsyncpa [#allocation3], 0
    %s12 = scalar_lea.sflag [#allocation3], 1
    %13 = vsyncpa %s12, 0
    %14 = vsyncpa [#allocation5], 0
    %15 = vsyncpa [#allocation8], 0
    loop: start=0, step=1, limit=52
    $region2: #{tpu_custom_call.1} parent=1 // loop_pre_header
      _
    $region3: #{tpu_custom_call.1} parent=1 // loop_header
      %s17 = sphi 0, %s21
      %p18 = scmp.ge.s32.totalorder %s17, 52
      %s24 = sphi 0, %s36
      %s25 = sphi 0, %s32
      %s26 = sphi 0, %s24
      %s27 = sphi 0, %s25
      %s28 = sphi 0, %s26
      %s29 = sphi 0, %s27
      %s39 = sphi 0, %s41
      %s42 = sphi 0, %s39
      %s43 = sphi 0, %s42
      %s59 = sphi 0, %s43
      %s65 = sphi 0, %s67
      %s68 = sphi 0, %s65
      %s69 = sphi 0, %s68
      %s85 = sphi 0, %s69
      %s89 = sphi 0, %s89
      %s91 = sphi 0, %s89
      %s92 = sphi 0, %s91
      %s106 = sphi 0, %s92
      %s110 = sphi 0, %s110
      %s112 = sphi 0, %s110
      %s113 = sphi 0, %s112
      %s127 = sphi 0, %s113
      %s133 = sphi 0, %s135
      %s136 = sphi 0, %s133
      %s137 = sphi 0, %s136
      %s153 = sphi 0, %s137
      %s159 = sphi 0, %s161
      %s162 = sphi 0, %s159
      %s163 = sphi 0, %s162
      %s179 = sphi 0, %s163
      %s187 = sphi 0, %s189
      %s190 = sphi 0, %s187
      %s191 = sphi 0, %s190
      %s207 = sphi 0, %s191
    $region4: #{tpu_custom_call.1} parent=1 // loop_header_branch
      %20 = sbr.rel (%p18) target = $region8
    $region5: #{tpu_custom_call.1} parent=1 // loop_body
      %s22 = ssub.s32 %s17, 1
      %s23 = ssub.s32 %s17, 2
      %s30 = sadd.s32 1, %s25
      %p31 = scmp.ge.s32.totalorder %s30, 1
      %s32 = scalar_select %p31, 0, %s30
      %s33 = sadd.s32 1, %s24
      %s34 = scalar_select %p31, %s33, %s24
      %p35 = scmp.ge.s32.totalorder %s34, 50
      %s36 = scalar_select %p35, 0, %s34
      %s37 = ssub.s32 %s24, %s36
      %p38 = scmp.eq.s32.totalorder %s37, 0
      %s40 = sadd.s32 %s39, 1
      %s41 = scalar_select %p38, %s39, %s40
      %p44 = pneg %p38
      %p45 = scmp.eq.s32.totalorder %s17, 49
      %p46 = por %p44, %p45
      %p47 = scmp.ne.s32.totalorder %s39, %s42
      %p48 = scmp.eq.s32.totalorder %s17, 0
      %p49 = por %p47, %p48
      %p50 = scmp.ne.s32.totalorder %s39, %s42
      %p51 = scmp.eq.s32.totalorder %s22, 49
      %p52 = por %p50, %p51
      %p53 = scmp.ne.s32.totalorder %s42, %s43
      %p54 = scmp.eq.s32.totalorder %s22, 0
      %p55 = por %p53, %p54
      %p56 = scmp.ne.s32.totalorder %s42, %s43
      %p57 = scmp.eq.s32.totalorder %s23, 49
      %p58 = por %p56, %p57
      %p60 = scmp.ne.s32.totalorder %s43, %s59
      %p61 = scmp.eq.s32.totalorder %s23, 0
      %p62 = por %p60, %p61
      %s63 = ssub.s32 %s25, %s32
      %p64 = scmp.eq.s32.totalorder %s63, 0
      %s66 = sadd.s32 %s65, 1
      %s67 = scalar_select %p64, %s65, %s66
      %p70 = pneg %p64
      %p71 = scmp.eq.s32.totalorder %s17, 49
      %p72 = por %p70, %p71
      %p73 = scmp.ne.s32.totalorder %s65, %s68
      %p74 = scmp.eq.s32.totalorder %s17, 0
      %p75 = por %p73, %p74
      %p76 = scmp.ne.s32.totalorder %s65, %s68
      %p77 = scmp.eq.s32.totalorder %s22, 49
      %p78 = por %p76, %p77
      %p79 = scmp.ne.s32.totalorder %s68, %s69
      %p80 = scmp.eq.s32.totalorder %s22, 0
      %p81 = por %p79, %p80
      %p82 = scmp.ne.s32.totalorder %s68, %s69
      %p83 = scmp.eq.s32.totalorder %s23, 49
      %p84 = por %p82, %p83
      %p86 = scmp.ne.s32.totalorder %s69, %s85
      %p87 = scmp.eq.s32.totalorder %s23, 0
      %p88 = por %p86, %p87
      %s90 = sadd.s32 %s89, 1
      %p93 = scmp.eq.s32.totalorder %s17, 49
      %p94 = scmp.ne.s32.totalorder %s89, %s91
      %p95 = scmp.eq.s32.totalorder %s17, 0
      %p96 = por %p94, %p95
      %p97 = scmp.ne.s32.totalorder %s89, %s91
      %p98 = scmp.eq.s32.totalorder %s22, 49
      %p99 = por %p97, %p98
      %p100 = scmp.ne.s32.totalorder %s91, %s92
      %p101 = scmp.eq.s32.totalorder %s22, 0
      %p102 = por %p100, %p101
      %p103 = scmp.ne.s32.totalorder %s91, %s92
      %p104 = scmp.eq.s32.totalorder %s23, 49
      %p105 = por %p103, %p104
      %p107 = scmp.ne.s32.totalorder %s92, %s106
      %p108 = scmp.eq.s32.totalorder %s23, 0
      %p109 = por %p107, %p108
      %s111 = sadd.s32 %s110, 1
      %p114 = scmp.eq.s32.totalorder %s17, 49
      %p115 = scmp.ne.s32.totalorder %s110, %s112
      %p116 = scmp.eq.s32.totalorder %s17, 0
      %p117 = por %p115, %p116
      %p118 = scmp.ne.s32.totalorder %s110, %s112
      %p119 = scmp.eq.s32.totalorder %s22, 49
      %p120 = por %p118, %p119
      %p121 = scmp.ne.s32.totalorder %s112, %s113
      %p122 = scmp.eq.s32.totalorder %s22, 0
      %p123 = por %p121, %p122
      %p124 = scmp.ne.s32.totalorder %s112, %s113
      %p125 = scmp.eq.s32.totalorder %s23, 49
      %p126 = por %p124, %p125
      %p128 = scmp.ne.s32.totalorder %s113, %s127
      %p129 = scmp.eq.s32.totalorder %s23, 0
      %p130 = por %p128, %p129
      %s131 = ssub.s32 %s25, %s32
      %p132 = scmp.eq.s32.totalorder %s131, 0
      %s134 = sadd.s32 %s133, 1
      %s135 = scalar_select %p132, %s133, %s134
      %p138 = pneg %p132
      %p139 = scmp.eq.s32.totalorder %s17, 49
      %p140 = por %p138, %p139
      %p141 = scmp.ne.s32.totalorder %s133, %s136
      %p142 = scmp.eq.s32.totalorder %s17, 0
      %p143 = por %p141, %p142
      %p144 = scmp.ne.s32.totalorder %s133, %s136
      %p145 = scmp.eq.s32.totalorder %s22, 49
      %p146 = por %p144, %p145
      %p147 = scmp.ne.s32.totalorder %s136, %s137
      %p148 = scmp.eq.s32.totalorder %s22, 0
      %p149 = por %p147, %p148
      %p150 = scmp.ne.s32.totalorder %s136, %s137
      %p151 = scmp.eq.s32.totalorder %s23, 49
      %p152 = por %p150, %p151
      %p154 = scmp.ne.s32.totalorder %s137, %s153
      %p155 = scmp.eq.s32.totalorder %s23, 0
      %p156 = por %p154, %p155
      %s157 = ssub.s32 %s25, %s32
      %p158 = scmp.eq.s32.totalorder %s157, 0
      %s160 = sadd.s32 %s159, 1
      %s161 = scalar_select %p158, %s159, %s160
      %p164 = pneg %p158
      %p165 = scmp.eq.s32.totalorder %s17, 49
      %p166 = por %p164, %p165
      %p167 = scmp.ne.s32.totalorder %s159, %s162
      %p168 = scmp.eq.s32.totalorder %s17, 0
      %p169 = por %p167, %p168
      %p170 = scmp.ne.s32.totalorder %s159, %s162
      %p171 = scmp.eq.s32.totalorder %s22, 49
      %p172 = por %p170, %p171
      %p173 = scmp.ne.s32.totalorder %s162, %s163
      %p174 = scmp.eq.s32.totalorder %s22, 0
      %p175 = por %p173, %p174
      %p176 = scmp.ne.s32.totalorder %s162, %s163
      %p177 = scmp.eq.s32.totalorder %s23, 49
      %p178 = por %p176, %p177
      %p180 = scmp.ne.s32.totalorder %s163, %s179
      %p181 = scmp.eq.s32.totalorder %s23, 0
      %p182 = por %p180, %p181
      %s183 = ssub.s32 %s24, %s36
      %s184 = ssub.s32 %s25, %s32
      %s185 = sor.u32 %s183, %s184
      %p186 = scmp.eq.s32.totalorder %s185, 0
      %s188 = sadd.s32 %s187, 1
      %s189 = scalar_select %p186, %s187, %s188
      %p192 = pneg %p186
      %p193 = scmp.eq.s32.totalorder %s17, 49
      %p194 = por %p192, %p193
      %p195 = scmp.ne.s32.totalorder %s187, %s190
      %p196 = scmp.eq.s32.totalorder %s17, 0
      %p197 = por %p195, %p196
      %p198 = scmp.ne.s32.totalorder %s187, %s190
      %p199 = scmp.eq.s32.totalorder %s22, 49
      %p200 = por %p198, %p199
      %p201 = scmp.ne.s32.totalorder %s190, %s191
      %p202 = scmp.eq.s32.totalorder %s22, 0
      %p203 = por %p201, %p202
      %p204 = scmp.ne.s32.totalorder %s190, %s191
      %p205 = scmp.eq.s32.totalorder %s23, 49
      %p206 = por %p204, %p205
      %p208 = scmp.ne.s32.totalorder %s191, %s207
      %p209 = scmp.eq.s32.totalorder %s23, 0
      %p210 = por %p208, %p209
      %p211 = scmp.le.s32.totalorder 1, %s17
      %p212 = scmp.lt.s32.totalorder %s17, 51
      %p213 = pnand %p211, %p212
      %p214 = pneg %p213
      // Predicated region
      $region9: #{tpu_custom_call.1} parent=5 // pred_check
        _
      $region10: #{tpu_custom_call.1} parent=5 // pred_check_branch
        %216 = sbr.rel (%p213) target = $region12
      $region11: #{tpu_custom_call.1} parent=5 // pred_region
        %s217 = ssub.s32 %s17, 1
        // Predicated region
        $region13: #{tpu_custom_call.1} parent=11 // pred_check
          %p218 = pneg %p81
        $region14: #{tpu_custom_call.1} parent=11 // pred_check_branch
          %220 = sbr.rel (%p218) target = $region16
        $region15: #{tpu_custom_call.1} parent=11 // pred_region
          %p221 = scmp.lt.s32.totalorder %s27, 0
          %s222 = scalar_select %p221, %s27, 0
          %s223 = smul.addr %s222, 4
          %s224 = scalar_lea.vmem %s1, %s223
        $region16: #{tpu_custom_call.1} parent=11 // pred_fallthru
          _
        // Predicated region
        $region17: #{tpu_custom_call.1} parent=11 // pred_check
          %p225 = pneg %p102
        $region18: #{tpu_custom_call.1} parent=11 // pred_check_branch
          %227 = sbr.rel (%p225) target = $region20
        $region19: #{tpu_custom_call.1} parent=11 // pred_region
          %s229 = ssub.s32 16, 16
          %230 = vsyncadd [#allocation5], %s229
          %s232 = sshll.u32 [#allocation4], 4
          %s233 = int_to_ptr.vmem [resolvable:$true] %s232
          %235 = dma.hbm_to_vmem [thread:$0]  %s2, 16, %s233, [#allocation5]
        $region20: #{tpu_custom_call.1} parent=11 // pred_fallthru
          _
        // Predicated region
        $region21: #{tpu_custom_call.1} parent=11 // pred_check
          %p236 = pneg %p123
        $region22: #{tpu_custom_call.1} parent=11 // pred_check_branch
          %238 = sbr.rel (%p236) target = $region24
        $region23: #{tpu_custom_call.1} parent=11 // pred_region
          %s240 = ssub.s32 16, 16
          %241 = vsyncadd [#allocation5], %s240
          %s243 = sshll.u32 [#allocation6], 4
          %s244 = int_to_ptr.vmem [resolvable:$true] %s243
          %246 = dma.hbm_to_vmem [thread:$0]  %s3, 16, %s244, [#allocation5]
        $region24: #{tpu_custom_call.1} parent=11 // pred_fallthru
          _
        // Predicated region
        $region25: #{tpu_custom_call.1} parent=11 // pred_check
          %p247 = pneg %p149
        $region26: #{tpu_custom_call.1} parent=11 // pred_check_branch
          %249 = sbr.rel (%p247) target = $region28
        $region27: #{tpu_custom_call.1} parent=11 // pred_region
          %s251 = ssub.s32 16, 16
          %252 = vsyncadd [#allocation8], %s251
          %s253 = smul.addr %s27, 16
          %s254 = scalar_lea.hbm %s4, %s253
          %s256 = sshll.u32 [#allocation7], 4
          %s257 = int_to_ptr.vmem [resolvable:$true] %s256
          %259 = dma.hbm_to_vmem [thread:$0]  %s254, 16, %s257, [#allocation8]
        $region28: #{tpu_custom_call.1} parent=11 // pred_fallthru
          _
        // Predicated region
        $region29: #{tpu_custom_call.1} parent=11 // pred_check
          %p260 = pneg %p175
        $region30: #{tpu_custom_call.1} parent=11 // pred_check_branch
          %262 = sbr.rel (%p260) target = $region32
        $region31: #{tpu_custom_call.1} parent=11 // pred_region
          %s264 = ssub.s32 16, 16
          %265 = vsyncadd [#allocation8], %s264
          %s266 = smul.addr %s27, 16
          %s267 = scalar_lea.hbm %s5, %s266
          %s269 = sshll.u32 [#allocation9], 4
          %s270 = int_to_ptr.vmem [resolvable:$true] %s269
          %272 = dma.hbm_to_vmem [thread:$0]  %s267, 16, %s270, [#allocation8]
        $region32: #{tpu_custom_call.1} parent=11 // pred_fallthru
          _
      $region12: #{tpu_custom_call.1} parent=5 // pred_fallthru
        _
      %p273 = scmp.lt.s32.totalorder %s17, 50
      // Predicated region
      $region33: #{tpu_custom_call.1} parent=5 // pred_check
        %p274 = pneg %p273
      $region34: #{tpu_custom_call.1} parent=5 // pred_check_branch
        %276 = sbr.rel (%p274) target = $region36
      $region35: #{tpu_custom_call.1} parent=5 // pred_region
        // Predicated region
        $region37: #{tpu_custom_call.1} parent=35 // pred_check
          %p277 = pneg %p49
        $region38: #{tpu_custom_call.1} parent=35 // pred_check_branch
          %279 = sbr.rel (%p277) target = $region40
        $region39: #{tpu_custom_call.1} parent=35 // pred_region
          %s280 = sand.u32 %s39, 1
          %s281 = scalar_lea.sflag [#allocation3], %s280
          %s282 = sand.u32 %s39, 1
          %s283 = smul.addr %s282, 256
          %s284 = scalar_lea.vmem [#allocation2], %s283
          %s285 = smul.u32 64, %s24
          %s287 = ssub.s32 4096, 4096
          %288 = vsyncadd %s281, %s287
          %s289 = smul.addr %s285, 64
          %s290 = scalar_lea.hbm %s0, %s289
          %s291 = sshll.u32 %s284, 4
          %s292 = int_to_ptr.vmem [resolvable:$true] %s291
          %297 = dma.hbm_to_vmem [thread:$0]  %s290, 4096, %s292, %s281, 64, 64, 4
        $region40: #{tpu_custom_call.1} parent=35 // pred_fallthru
          _
      $region36: #{tpu_custom_call.1} parent=5 // pred_fallthru
        _
      %p298 = scmp.le.s32.totalorder 1, %s17
      %p299 = scmp.lt.s32.totalorder %s17, 51
      %p300 = pnand %p298, %p299
      %p301 = pneg %p300
      // Predicated region
      $region41: #{tpu_custom_call.1} parent=5 // pred_check
        _
      $region42: #{tpu_custom_call.1} parent=5 // pred_check_branch
        %303 = sbr.rel (%p300) target = $region44
      $region43: #{tpu_custom_call.1} parent=5 // pred_region
        %s304 = ssub.s32 %s17, 1
        %s305 = sand.u32 %s42, 1
        %s306 = scalar_lea.sflag [#allocation3], %s305
        %s307 = sand.u32 %s42, 1
        %s308 = smul.addr %s307, 256
        %s309 = scalar_lea.vmem [#allocation2], %s308
        // Predicated region
        $region45: #{tpu_custom_call.1} parent=43 // pred_check
          %p310 = pneg %p55
        $region46: #{tpu_custom_call.1} parent=43 // pred_check_branch
          %312 = sbr.rel (%p310) target = $region48
        $region47: #{tpu_custom_call.1} parent=43 // pred_region
          %313 = dma.done %s306, 4096
        $region48: #{tpu_custom_call.1} parent=43 // pred_fallthru
          _
        // Predicated region
        $region49: #{tpu_custom_call.1} parent=43 // pred_check
          %p314 = pneg %p102
        $region50: #{tpu_custom_call.1} parent=43 // pred_check_branch
          %316 = sbr.rel (%p314) target = $region52
        $region51: #{tpu_custom_call.1} parent=43 // pred_region
          %317 = dma.done [#allocation5], 16
        $region52: #{tpu_custom_call.1} parent=43 // pred_fallthru
          _
        // Predicated region
        $region53: #{tpu_custom_call.1} parent=43 // pred_check
          %p318 = pneg %p123
        $region54: #{tpu_custom_call.1} parent=43 // pred_check_branch
          %320 = sbr.rel (%p318) target = $region56
        $region55: #{tpu_custom_call.1} parent=43 // pred_region
          %321 = dma.done [#allocation5], 16
        $region56: #{tpu_custom_call.1} parent=43 // pred_fallthru
          _
        // Predicated region
        $region57: #{tpu_custom_call.1} parent=43 // pred_check
          %p322 = pneg %p149
        $region58: #{tpu_custom_call.1} parent=43 // pred_check_branch
          %324 = sbr.rel (%p322) target = $region60
        $region59: #{tpu_custom_call.1} parent=43 // pred_region
          %325 = dma.done [#allocation8], 16
        $region60: #{tpu_custom_call.1} parent=43 // pred_fallthru
          _
        // Predicated region
        $region61: #{tpu_custom_call.1} parent=43 // pred_check
          %p326 = pneg %p175
        $region62: #{tpu_custom_call.1} parent=43 // pred_check_branch
          %328 = sbr.rel (%p326) target = $region64
        $region63: #{tpu_custom_call.1} parent=43 // pred_region
          %329 = dma.done [#allocation8], 16
        $region64: #{tpu_custom_call.1} parent=43 // pred_fallthru
          _
        %s330 = sand.u32 %s42, 1
        %s331 = scalar_lea.sflag [#allocation3], %s330
        %s332 = sand.u32 %s42, 1
        %s333 = smul.addr %s332, 256
        %s334 = scalar_lea.vmem [#allocation2], %s333
        %p335 = pneg %p55
        %p336 = pneg %p52
        %p337 = scmp.lt.s32.totalorder %s27, 0
        %s338 = scalar_select %p337, %s27, 0
        %s339 = smul.addr %s338, 4
        %s340 = scalar_lea.vmem %s1, %s339
        %p341 = pneg %p81
        %p342 = pneg %p78
        %p343 = pneg %p102
        %p344 = pneg %p99
        %p345 = pneg %p123
        %p346 = pneg %p120
        %p347 = pneg %p149
        %p348 = pneg %p146
        %p349 = pneg %p175
        %p350 = pneg %p172
        %p351 = pneg %p203
        %p352 = pneg %p200
        %s353 = smul.u32 64, %s26
        %p354 = scmp.lt.s32.totalorder %s353, 3199
        %s355 = scalar_select %p354, %s353, 3199
        %p356 = scmp.lt.s32.totalorder %s27, 0
        %s357 = scalar_select %p356, %s27, 0
        %s358 = sadd.s32 %s357, %s355
        %s359 = smul.addr %s358, 4
        %s360 = scalar_lea.vmem %s6, %s359
        %s361 = smul.u32 64, %s26
        %p362 = scmp.lt.s32.totalorder %s27, 0
        %s363 = scalar_select %p362, %s27, 0
        %s364 = smul.addr %s363, 4
        %s365 = scalar_lea.vmem %s1, %s364
        %s366 = smul.u32 64, %s26
        %p367 = scmp.lt.s32.totalorder %s366, 3199
        %s368 = scalar_select %p367, %s366, 3199
        %p369 = scmp.lt.s32.totalorder %s27, 0
        %s370 = scalar_select %p369, %s27, 0
        %s371 = sadd.s32 %s370, %s368
        %s372 = smul.addr %s371, 4
        %s373 = scalar_lea.vmem %s6, %s372
        %s374 = smul.u32 64, %s26
        %v376 = vld [vmem:[%s309] sm:$0xf]
        %v377 = vld [vmem:[%s309 + $0x4] sm:$0xf]
        %v378 = vld [vmem:[%s309 + $0x8] sm:$0xf]
        %v379 = vld [vmem:[%s309 + $0xc] sm:$0xf]
        %v380 = vld [vmem:[%s309 + $0x10] sm:$0xf]
        %v381 = vld [vmem:[%s309 + $0x14] sm:$0xf]
        %v382 = vld [vmem:[%s309 + $0x18] sm:$0xf]
        %v383 = vld [vmem:[%s309 + $0x1c] sm:$0xf]
        %v384 = vld [vmem:[%s309 + $0x20] sm:$0xf]
        %v385 = vld [vmem:[%s309 + $0x24] sm:$0xf]
        %v386 = vld [vmem:[%s309 + $0x28] sm:$0xf]
        %v387 = vld [vmem:[%s309 + $0x2c] sm:$0xf]
        %v388 = vld [vmem:[%s309 + $0x30] sm:$0xf]
        %v389 = vld [vmem:[%s309 + $0x34] sm:$0xf]
        %v390 = vld [vmem:[%s309 + $0x38] sm:$0xf]
        %v391 = vld [vmem:[%s309 + $0x3c] sm:$0xf]
        %v392 = vld [vmem:[%s309 + $0x40] sm:$0xf]
        %v393 = vld [vmem:[%s309 + $0x44] sm:$0xf]
        %v394 = vld [vmem:[%s309 + $0x48] sm:$0xf]
        %v395 = vld [vmem:[%s309 + $0x4c] sm:$0xf]
        %v396 = vld [vmem:[%s309 + $0x50] sm:$0xf]
        %v397 = vld [vmem:[%s309 + $0x54] sm:$0xf]
        %v398 = vld [vmem:[%s309 + $0x58] sm:$0xf]
        %v399 = vld [vmem:[%s309 + $0x5c] sm:$0xf]
        %v400 = vld [vmem:[%s309 + $0x60] sm:$0xf]
        %v401 = vld [vmem:[%s309 + $0x64] sm:$0xf]
        %v402 = vld [vmem:[%s309 + $0x68] sm:$0xf]
        %v403 = vld [vmem:[%s309 + $0x6c] sm:$0xf]
        %v404 = vld [vmem:[%s309 + $0x70] sm:$0xf]
        %v405 = vld [vmem:[%s309 + $0x74] sm:$0xf]
        %v406 = vld [vmem:[%s309 + $0x78] sm:$0xf]
        %v407 = vld [vmem:[%s309 + $0x7c] sm:$0xf]
        %v408 = vld [vmem:[%s309 + $0x80] sm:$0xf]
        %v409 = vld [vmem:[%s309 + $0x84] sm:$0xf]
        %v410 = vld [vmem:[%s309 + $0x88] sm:$0xf]
        %v411 = vld [vmem:[%s309 + $0x8c] sm:$0xf]
        %v412 = vld [vmem:[%s309 + $0x90] sm:$0xf]
        %v413 = vld [vmem:[%s309 + $0x94] sm:$0xf]
        %v414 = vld [vmem:[%s309 + $0x98] sm:$0xf]
        %v415 = vld [vmem:[%s309 + $0x9c] sm:$0xf]
        %v416 = vld [vmem:[%s309 + $0xa0] sm:$0xf]
        %v417 = vld [vmem:[%s309 + $0xa4] sm:$0xf]
        %v418 = vld [vmem:[%s309 + $0xa8] sm:$0xf]
        %v419 = vld [vmem:[%s309 + $0xac] sm:$0xf]
        %v420 = vld [vmem:[%s309 + $0xb0] sm:$0xf]
        %v421 = vld [vmem:[%s309 + $0xb4] sm:$0xf]
        %v422 = vld [vmem:[%s309 + $0xb8] sm:$0xf]
        %v423 = vld [vmem:[%s309 + $0xbc] sm:$0xf]
        %v424 = vld [vmem:[%s309 + $0xc0] sm:$0xf]
        %v425 = vld [vmem:[%s309 + $0xc4] sm:$0xf]
        %v426 = vld [vmem:[%s309 + $0xc8] sm:$0xf]
        %v427 = vld [vmem:[%s309 + $0xcc] sm:$0xf]
        %v428 = vld [vmem:[%s309 + $0xd0] sm:$0xf]
        %v429 = vld [vmem:[%s309 + $0xd4] sm:$0xf]
        %v430 = vld [vmem:[%s309 + $0xd8] sm:$0xf]
        %v431 = vld [vmem:[%s309 + $0xdc] sm:$0xf]
        %v432 = vld [vmem:[%s309 + $0xe0] sm:$0xf]
        %v433 = vld [vmem:[%s309 + $0xe4] sm:$0xf]
        %v434 = vld [vmem:[%s309 + $0xe8] sm:$0xf]
        %v435 = vld [vmem:[%s309 + $0xec] sm:$0xf]
        %v436 = vld [vmem:[%s309 + $0xf0] sm:$0xf]
        %v437 = vld [vmem:[%s309 + $0xf4] sm:$0xf]
        %v438 = vld [vmem:[%s309 + $0xf8] sm:$0xf]
        %v439 = vld [vmem:[%s309 + $0xfc] sm:$0xf]
        %v440 = vld [vmem:[%s365] sm:$0xf]
        %v441 = vld [vmem:[%s365 + $0x4] sm:$0xf]
        %v442 = vld [vmem:[%s365 + $0x8] sm:$0xf]
        %v443 = vld [vmem:[%s365 + $0xc] sm:$0xf]
        %v444 = vld [vmem:[%s365 + $0x10] sm:$0xf]
        %v445 = vld [vmem:[%s365 + $0x14] sm:$0xf]
        %v446 = vld [vmem:[%s365 + $0x18] sm:$0xf]
        %v447 = vld [vmem:[%s365 + $0x1c] sm:$0xf]
        %v448 = vld [vmem:[%s365 + $0x20] sm:$0xf]
        %v449 = vld [vmem:[%s365 + $0x24] sm:$0xf]
        %v450 = vld [vmem:[%s365 + $0x28] sm:$0xf]
        %v451 = vld [vmem:[%s365 + $0x2c] sm:$0xf]
        %v452 = vld [vmem:[%s365 + $0x30] sm:$0xf]
        %v453 = vld [vmem:[%s365 + $0x34] sm:$0xf]
        %v454 = vld [vmem:[%s365 + $0x38] sm:$0xf]
        %v455 = vld [vmem:[%s365 + $0x3c] sm:$0xf]
        %v520 = vunpack.c.l.b16 %v376
        %v521 = vunpack.c.l.b16 %v377
        %v522 = vunpack.c.l.b16 %v378
        %v523 = vunpack.c.l.b16 %v379
        %v524 = vunpack.c.l.b16 %v380
        %v525 = vunpack.c.l.b16 %v381
        %v526 = vunpack.c.l.b16 %v382
        %v527 = vunpack.c.l.b16 %v383
        %v528 = vunpack.c.l.b16 %v384
        %v529 = vunpack.c.l.b16 %v385
        %v530 = vunpack.c.l.b16 %v386
        %v531 = vunpack.c.l.b16 %v387
        %v532 = vunpack.c.l.b16 %v388
        %v533 = vunpack.c.l.b16 %v389
        %v534 = vunpack.c.l.b16 %v390
        %v535 = vunpack.c.l.b16 %v391
        %v536 = vunpack.c.l.b16 %v392
        %v537 = vunpack.c.l.b16 %v393
        %v538 = vunpack.c.l.b16 %v394
        %v539 = vunpack.c.l.b16 %v395
        %v540 = vunpack.c.l.b16 %v396
        %v541 = vunpack.c.l.b16 %v397
        %v542 = vunpack.c.l.b16 %v398
        %v543 = vunpack.c.l.b16 %v399
        %v544 = vunpack.c.l.b16 %v400
        %v545 = vunpack.c.l.b16 %v401
        %v546 = vunpack.c.l.b16 %v402
        %v547 = vunpack.c.l.b16 %v403
        %v548 = vunpack.c.l.b16 %v404
        %v549 = vunpack.c.l.b16 %v405
        %v550 = vunpack.c.l.b16 %v406
        %v551 = vunpack.c.l.b16 %v407
        %v552 = vunpack.c.l.b16 %v408
        %v553 = vunpack.c.l.b16 %v409
        %v554 = vunpack.c.l.b16 %v410
        %v555 = vunpack.c.l.b16 %v411
        %v556 = vunpack.c.l.b16 %v412
        %v557 = vunpack.c.l.b16 %v413
        %v558 = vunpack.c.l.b16 %v414
        %v559 = vunpack.c.l.b16 %v415
        %v560 = vunpack.c.l.b16 %v416
        %v561 = vunpack.c.l.b16 %v417
        %v562 = vunpack.c.l.b16 %v418
        %v563 = vunpack.c.l.b16 %v419
        %v564 = vunpack.c.l.b16 %v420
        %v565 = vunpack.c.l.b16 %v421
        %v566 = vunpack.c.l.b16 %v422
        %v567 = vunpack.c.l.b16 %v423
        %v568 = vunpack.c.l.b16 %v424
        %v569 = vunpack.c.l.b16 %v425
        %v570 = vunpack.c.l.b16 %v426
        %v571 = vunpack.c.l.b16 %v427
        %v572 = vunpack.c.l.b16 %v428
        %v573 = vunpack.c.l.b16 %v429
        %v574 = vunpack.c.l.b16 %v430
        %v575 = vunpack.c.l.b16 %v431
        %v576 = vunpack.c.l.b16 %v432
        %v577 = vunpack.c.l.b16 %v433
        %v578 = vunpack.c.l.b16 %v434
        %v579 = vunpack.c.l.b16 %v435
        %v580 = vunpack.c.l.b16 %v436
        %v581 = vunpack.c.l.b16 %v437
        %v582 = vunpack.c.l.b16 %v438
        %v583 = vunpack.c.l.b16 %v439
        %v584 = vpack.c.b16 %v521, %v520
        %v585 = vpack.c.b16 %v523, %v522
        %v586 = vpack.c.b16 %v525, %v524
        %v587 = vpack.c.b16 %v527, %v526
        %v588 = vpack.c.b16 %v529, %v528
        %v589 = vpack.c.b16 %v531, %v530
        %v590 = vpack.c.b16 %v533, %v532
        %v591 = vpack.c.b16 %v535, %v534
        %v592 = vpack.c.b16 %v537, %v536
        %v593 = vpack.c.b16 %v539, %v538
        %v594 = vpack.c.b16 %v541, %v540
        %v595 = vpack.c.b16 %v543, %v542
        %v596 = vpack.c.b16 %v545, %v544
        %v597 = vpack.c.b16 %v547, %v546
        %v598 = vpack.c.b16 %v549, %v548
        %v599 = vpack.c.b16 %v551, %v550
        %v600 = vpack.c.b16 %v553, %v552
        %v601 = vpack.c.b16 %v555, %v554
        %v602 = vpack.c.b16 %v557, %v556
        %v603 = vpack.c.b16 %v559, %v558
        %v604 = vpack.c.b16 %v561, %v560
        %v605 = vpack.c.b16 %v563, %v562
        %v606 = vpack.c.b16 %v565, %v564
        %v607 = vpack.c.b16 %v567, %v566
        %v608 = vpack.c.b16 %v569, %v568
        %v609 = vpack.c.b16 %v571, %v570
        %v610 = vpack.c.b16 %v573, %v572
        %v611 = vpack.c.b16 %v575, %v574
        %v612 = vpack.c.b16 %v577, %v576
        %v613 = vpack.c.b16 %v579, %v578
        %v614 = vpack.c.b16 %v581, %v580
        %v615 = vpack.c.b16 %v583, %v582
        %v664 = vunpack.c.l.b16 %v440
        %v665 = vunpack.c.l.b16 %v441
        %v666 = vunpack.c.l.b16 %v442
        %v667 = vunpack.c.l.b16 %v443
        %v668 = vunpack.c.l.b16 %v444
        %v669 = vunpack.c.l.b16 %v445
        %v670 = vunpack.c.l.b16 %v446
        %v671 = vunpack.c.l.b16 %v447
        %v672 = vunpack.c.l.b16 %v448
        %v673 = vunpack.c.l.b16 %v449
        %v674 = vunpack.c.l.b16 %v450
        %v675 = vunpack.c.l.b16 %v451
        %v676 = vunpack.c.l.b16 %v452
        %v677 = vunpack.c.l.b16 %v453
        %v678 = vunpack.c.l.b16 %v454
        %v679 = vunpack.c.l.b16 %v455
        %v680 = vpack.c.b16 %v665, %v664
        %v681 = vpack.c.b16 %v667, %v666
        %v682 = vpack.c.b16 %v669, %v668
        %v683 = vpack.c.b16 %v671, %v670
        %v684 = vpack.c.b16 %v673, %v672
        %v685 = vpack.c.b16 %v675, %v674
        %v686 = vpack.c.b16 %v677, %v676
        %v687 = vpack.c.b16 %v679, %v678
        %696 = vmatprep.subr.bf16.mxu0 0
        %697 = vmatpush1.bf16.msra.mxu0 %v687
        %698 = vmatprep.subr.bf16.mxu0 0
        %699 = vmatpush1.bf16.msra.mxu0 %v686
        %700 = vmatprep.subr.bf16.mxu0 0
        %701 = vmatpush1.bf16.msra.mxu0 %v685
        %702 = vmatprep.subr.bf16.mxu0 0
        %703 = vmatpush1.bf16.msra.mxu0 %v684
        %704 = vmatprep.subr.bf16.mxu0 0
        %705 = vmatpush1.bf16.msra.mxu0 %v683
        %706 = vmatprep.subr.bf16.mxu0 0
        %707 = vmatpush1.bf16.msra.mxu0 %v682
        %708 = vmatprep.subr.bf16.mxu0 0
        %709 = vmatpush1.bf16.msra.mxu0 %v681
        %710 = vmatprep.subr.bf16.mxu0 0
        %711 = vmatpush1.bf16.msra.mxu0 %v680
        %712 = vmatprep.subr.bf16.mxu0 0
        %713 = vmatpush2.bf16.msra.mxu0 0
        %714 = vmatprep.subr.bf16.mxu0 0
        %715 = vmatpush2.bf16.msra.mxu0 0
        %716 = vmatprep.subr.bf16.mxu0 0
        %717 = vmatpush2.bf16.msra.mxu0 0
        %718 = vmatprep.subr.bf16.mxu0 0
        %719 = vmatpush2.bf16.msra.mxu0 0
        %720 = vmatprep.subr.bf16.mxu0 0
        %721 = vmatpush2.bf16.msra.mxu0 0
        %722 = vmatprep.subr.bf16.mxu0 0
        %723 = vmatpush2.bf16.msra.mxu0 0
        %724 = vmatprep.subr.bf16.mxu0 0
        %725 = vmatpush2.bf16.msra.mxu0 0
        %726 = vmatprep.subr.bf16.mxu0 0
        %727 = vmatpush2.bf16.msra.mxu0 0
        %728 = vmatprep.mubr.bf16.mxu0 0
        %729 = vmatmul.mubr.bf16.gmra.mxu0 %v584
        %v730 = vpop.f32.mrf.mxu0
        %v731 = vadd.f32 0.0, %v730
        %v732 = vpop.f32.mrf.mxu0
        %v733 = vpop.f32.mrf.mxu0
        %v734 = vadd.f32 0.0, %v733
        %v735 = vpop.f32.mrf.mxu0
        %736 = vmatprep.mubr.bf16.mxu0 0
        %737 = vmatmul.mubr.bf16.gmra.mxu0 %v585
        %v738 = vpop.f32.mrf.mxu0
        %v739 = vadd.f32 0.0, %v738
        %v740 = vpop.f32.mrf.mxu0
        %v741 = vpop.f32.mrf.mxu0
        %v742 = vadd.f32 0.0, %v741
        %v743 = vpop.f32.mrf.mxu0
        %744 = vmatprep.mubr.bf16.mxu0 0
        %745 = vmatmul.mubr.bf16.gmra.mxu0 %v586
        %v746 = vpop.f32.mrf.mxu0
        %v747 = vadd.f32 0.0, %v746
        %v748 = vpop.f32.mrf.mxu0
        %v749 = vpop.f32.mrf.mxu0
        %v750 = vadd.f32 0.0, %v749
        %v751 = vpop.f32.mrf.mxu0
        %752 = vmatprep.mubr.bf16.mxu0 0
        %753 = vmatmul.mubr.bf16.gmra.mxu0 %v587
        %v754 = vpop.f32.mrf.mxu0
        %v755 = vadd.f32 0.0, %v754
        %v756 = vpop.f32.mrf.mxu0
        %v757 = vpop.f32.mrf.mxu0
        %v758 = vadd.f32 0.0, %v757
        %v759 = vpop.f32.mrf.mxu0
        %760 = vmatprep.mubr.bf16.mxu0 0
        %761 = vmatmul.mubr.bf16.gmra.mxu0 %v588
        %v762 = vpop.f32.mrf.mxu0
        %v763 = vadd.f32 0.0, %v762
        %v764 = vpop.f32.mrf.mxu0
        %v765 = vpop.f32.mrf.mxu0
        %v766 = vadd.f32 0.0, %v765
        %v767 = vpop.f32.mrf.mxu0
        %768 = vmatprep.mubr.bf16.mxu0 0
        %769 = vmatmul.mubr.bf16.gmra.mxu0 %v589
        %v770 = vpop.f32.mrf.mxu0
        %v771 = vadd.f32 0.0, %v770
        %v772 = vpop.f32.mrf.mxu0
        %v773 = vpop.f32.mrf.mxu0
        %v774 = vadd.f32 0.0, %v773
        %v775 = vpop.f32.mrf.mxu0
        %776 = vmatprep.mubr.bf16.mxu0 0
        %777 = vmatmul.mubr.bf16.gmra.mxu0 %v590
        %v778 = vpop.f32.mrf.mxu0
        %v779 = vadd.f32 0.0, %v778
        %v780 = vpop.f32.mrf.mxu0
        %v781 = vpop.f32.mrf.mxu0
        %v782 = vadd.f32 0.0, %v781
        %v783 = vpop.f32.mrf.mxu0
        %784 = vmatprep.mubr.bf16.mxu0 0
        %785 = vmatmul.mubr.bf16.gmra.mxu0 %v591
        %v786 = vpop.f32.mrf.mxu0
        %v787 = vadd.f32 0.0, %v786
        %v788 = vpop.f32.mrf.mxu0
        %v789 = vpop.f32.mrf.mxu0
        %v790 = vadd.f32 0.0, %v789
        %v791 = vpop.f32.mrf.mxu0
        %792 = vmatprep.mubr.bf16.mxu0 0
        %793 = vmatmul.mubr.bf16.gmra.mxu0 %v592
        %v794 = vpop.f32.mrf.mxu0
        %v795 = vadd.f32 0.0, %v794
        %v796 = vpop.f32.mrf.mxu0
        %v797 = vpop.f32.mrf.mxu0
        %v798 = vadd.f32 0.0, %v797
        %v799 = vpop.f32.mrf.mxu0
        %800 = vmatprep.mubr.bf16.mxu0 0
        %801 = vmatmul.mubr.bf16.gmra.mxu0 %v593
        %v802 = vpop.f32.mrf.mxu0
        %v803 = vadd.f32 0.0, %v802
        %v804 = vpop.f32.mrf.mxu0
        %v805 = vpop.f32.mrf.mxu0
        %v806 = vadd.f32 0.0, %v805
        %v807 = vpop.f32.mrf.mxu0
        %808 = vmatprep.mubr.bf16.mxu0 0
        %809 = vmatmul.mubr.bf16.gmra.mxu0 %v594
        %v810 = vpop.f32.mrf.mxu0
        %v811 = vadd.f32 0.0, %v810
        %v812 = vpop.f32.mrf.mxu0
        %v813 = vpop.f32.mrf.mxu0
        %v814 = vadd.f32 0.0, %v813
        %v815 = vpop.f32.mrf.mxu0
        %816 = vmatprep.mubr.bf16.mxu0 0
        %817 = vmatmul.mubr.bf16.gmra.mxu0 %v595
        %v818 = vpop.f32.mrf.mxu0
        %v819 = vadd.f32 0.0, %v818
        %v820 = vpop.f32.mrf.mxu0
        %v821 = vpop.f32.mrf.mxu0
        %v822 = vadd.f32 0.0, %v821
        %v823 = vpop.f32.mrf.mxu0
        %824 = vmatprep.mubr.bf16.mxu0 0
        %825 = vmatmul.mubr.bf16.gmra.mxu0 %v596
        %v826 = vpop.f32.mrf.mxu0
        %v827 = vadd.f32 0.0, %v826
        %v828 = vpop.f32.mrf.mxu0
        %v829 = vpop.f32.mrf.mxu0
        %v830 = vadd.f32 0.0, %v829
        %v831 = vpop.f32.mrf.mxu0
        %832 = vmatprep.mubr.bf16.mxu0 0
        %833 = vmatmul.mubr.bf16.gmra.mxu0 %v597
        %v834 = vpop.f32.mrf.mxu0
        %v835 = vadd.f32 0.0, %v834
        %v836 = vpop.f32.mrf.mxu0
        %v837 = vpop.f32.mrf.mxu0
        %v838 = vadd.f32 0.0, %v837
        %v839 = vpop.f32.mrf.mxu0
        %840 = vmatprep.mubr.bf16.mxu0 0
        %841 = vmatmul.mubr.bf16.gmra.mxu0 %v598
        %v842 = vpop.f32.mrf.mxu0
        %v843 = vadd.f32 0.0, %v842
        %v844 = vpop.f32.mrf.mxu0
        %v845 = vpop.f32.mrf.mxu0
        %v846 = vadd.f32 0.0, %v845
        %v847 = vpop.f32.mrf.mxu0
        %848 = vmatprep.mubr.bf16.mxu0 0
        %849 = vmatmul.mubr.bf16.gmra.mxu0 %v599
        %v850 = vpop.f32.mrf.mxu0
        %v851 = vadd.f32 0.0, %v850
        %v852 = vpop.f32.mrf.mxu0
        %v853 = vpop.f32.mrf.mxu0
        %v854 = vadd.f32 0.0, %v853
        %v855 = vpop.f32.mrf.mxu0
        %856 = vmatprep.mubr.bf16.mxu0 0
        %857 = vmatmul.mubr.bf16.gmra.mxu0 %v600
        %v858 = vpop.f32.mrf.mxu0
        %v859 = vadd.f32 0.0, %v858
        %v860 = vpop.f32.mrf.mxu0
        %v861 = vpop.f32.mrf.mxu0
        %v862 = vadd.f32 0.0, %v861
        %v863 = vpop.f32.mrf.mxu0
        %864 = vmatprep.mubr.bf16.mxu0 0
        %865 = vmatmul.mubr.bf16.gmra.mxu0 %v601
        %v866 = vpop.f32.mrf.mxu0
        %v867 = vadd.f32 0.0, %v866
        %v868 = vpop.f32.mrf.mxu0
        %v869 = vpop.f32.mrf.mxu0
        %v870 = vadd.f32 0.0, %v869
        %v871 = vpop.f32.mrf.mxu0
        %872 = vmatprep.mubr.bf16.mxu0 0
        %873 = vmatmul.mubr.bf16.gmra.mxu0 %v602
        %v874 = vpop.f32.mrf.mxu0
        %v875 = vadd.f32 0.0, %v874
        %v876 = vpop.f32.mrf.mxu0
        %v877 = vpop.f32.mrf.mxu0
        %v878 = vadd.f32 0.0, %v877
        %v879 = vpop.f32.mrf.mxu0
        %880 = vmatprep.mubr.bf16.mxu0 0
        %881 = vmatmul.mubr.bf16.gmra.mxu0 %v603
        %v882 = vpop.f32.mrf.mxu0
        %v883 = vadd.f32 0.0, %v882
        %v884 = vpop.f32.mrf.mxu0
        %v885 = vpop.f32.mrf.mxu0
        %v886 = vadd.f32 0.0, %v885
        %v887 = vpop.f32.mrf.mxu0
        %888 = vmatprep.mubr.bf16.mxu0 0
        %889 = vmatmul.mubr.bf16.gmra.mxu0 %v604
        %v890 = vpop.f32.mrf.mxu0
        %v891 = vadd.f32 0.0, %v890
        %v892 = vpop.f32.mrf.mxu0
        %v893 = vpop.f32.mrf.mxu0
        %v894 = vadd.f32 0.0, %v893
        %v895 = vpop.f32.mrf.mxu0
        %896 = vmatprep.mubr.bf16.mxu0 0
        %897 = vmatmul.mubr.bf16.gmra.mxu0 %v605
        %v898 = vpop.f32.mrf.mxu0
        %v899 = vadd.f32 0.0, %v898
        %v900 = vpop.f32.mrf.mxu0
        %v901 = vpop.f32.mrf.mxu0
        %v902 = vadd.f32 0.0, %v901
        %v903 = vpop.f32.mrf.mxu0
        %904 = vmatprep.mubr.bf16.mxu0 0
        %905 = vmatmul.mubr.bf16.gmra.mxu0 %v606
        %v906 = vpop.f32.mrf.mxu0
        %v907 = vadd.f32 0.0, %v906
        %v908 = vpop.f32.mrf.mxu0
        %v909 = vpop.f32.mrf.mxu0
        %v910 = vadd.f32 0.0, %v909
        %v911 = vpop.f32.mrf.mxu0
        %912 = vmatprep.mubr.bf16.mxu0 0
        %913 = vmatmul.mubr.bf16.gmra.mxu0 %v607
        %v914 = vpop.f32.mrf.mxu0
        %v915 = vadd.f32 0.0, %v914
        %v916 = vpop.f32.mrf.mxu0
        %v917 = vpop.f32.mrf.mxu0
        %v918 = vadd.f32 0.0, %v917
        %v919 = vpop.f32.mrf.mxu0
        %920 = vmatprep.mubr.bf16.mxu0 0
        %921 = vmatmul.mubr.bf16.gmra.mxu0 %v608
        %v922 = vpop.f32.mrf.mxu0
        %v923 = vadd.f32 0.0, %v922
        %v924 = vpop.f32.mrf.mxu0
        %v925 = vpop.f32.mrf.mxu0
        %v926 = vadd.f32 0.0, %v925
        %v927 = vpop.f32.mrf.mxu0
        %928 = vmatprep.mubr.bf16.mxu0 0
        %929 = vmatmul.mubr.bf16.gmra.mxu0 %v609
        %v930 = vpop.f32.mrf.mxu0
        %v931 = vadd.f32 0.0, %v930
        %v932 = vpop.f32.mrf.mxu0
        %v933 = vpop.f32.mrf.mxu0
        %v934 = vadd.f32 0.0, %v933
        %v935 = vpop.f32.mrf.mxu0
        %936 = vmatprep.mubr.bf16.mxu0 0
        %937 = vmatmul.mubr.bf16.gmra.mxu0 %v610
        %v938 = vpop.f32.mrf.mxu0
        %v939 = vadd.f32 0.0, %v938
        %v940 = vpop.f32.mrf.mxu0
        %v941 = vpop.f32.mrf.mxu0
        %v942 = vadd.f32 0.0, %v941
        %v943 = vpop.f32.mrf.mxu0
        %944 = vmatprep.mubr.bf16.mxu0 0
        %945 = vmatmul.mubr.bf16.gmra.mxu0 %v611
        %v946 = vpop.f32.mrf.mxu0
        %v947 = vadd.f32 0.0, %v946
        %v948 = vpop.f32.mrf.mxu0
        %v949 = vpop.f32.mrf.mxu0
        %v950 = vadd.f32 0.0, %v949
        %v951 = vpop.f32.mrf.mxu0
        %952 = vmatprep.mubr.bf16.mxu0 0
        %953 = vmatmul.mubr.bf16.gmra.mxu0 %v612
        %v954 = vpop.f32.mrf.mxu0
        %v955 = vadd.f32 0.0, %v954
        %v956 = vpop.f32.mrf.mxu0
        %v957 = vpop.f32.mrf.mxu0
        %v958 = vadd.f32 0.0, %v957
        %v959 = vpop.f32.mrf.mxu0
        %960 = vmatprep.mubr.bf16.mxu0 0
        %961 = vmatmul.mubr.bf16.gmra.mxu0 %v613
        %v962 = vpop.f32.mrf.mxu0
        %v963 = vadd.f32 0.0, %v962
        %v964 = vpop.f32.mrf.mxu0
        %v965 = vpop.f32.mrf.mxu0
        %v966 = vadd.f32 0.0, %v965
        %v967 = vpop.f32.mrf.mxu0
        %968 = vmatprep.mubr.bf16.mxu0 0
        %969 = vmatmul.mubr.bf16.gmra.mxu0 %v614
        %v970 = vpop.f32.mrf.mxu0
        %v971 = vadd.f32 0.0, %v970
        %v972 = vpop.f32.mrf.mxu0
        %v973 = vpop.f32.mrf.mxu0
        %v974 = vadd.f32 0.0, %v973
        %v975 = vpop.f32.mrf.mxu0
        %976 = vmatprep.mubr.bf16.mxu0 0
        %977 = vmatmul.mubr.bf16.gmra.mxu0 %v615
        %v978 = vpop.f32.mrf.mxu0
        %v979 = vadd.f32 0.0, %v978
        %v980 = vpop.f32.mrf.mxu0
        %v981 = vpop.f32.mrf.mxu0
        %v982 = vadd.f32 0.0, %v981
        %v983 = vpop.f32.mrf.mxu0
        %984 = vdwg.mxu0
        %v985 = vld [vmem:[#allocation7] sm:$0x1]
        %v987 = vlaneseq
        %v988 = vshrl.u32 %v987, 7
        %v989 = vsub.s32 0, %v988
        %v990 = vrot.slane %v985, %v989
        %v992 = vmul.f32 %v731, %v990
        %v993 = vmul.f32 %v734, %v990
        %v994 = vmul.f32 %v739, %v990
        %v995 = vmul.f32 %v742, %v990
        %v996 = vmul.f32 %v747, %v990
        %v997 = vmul.f32 %v750, %v990
        %v998 = vmul.f32 %v755, %v990
        %v999 = vmul.f32 %v758, %v990
        %v1000 = vmul.f32 %v763, %v990
        %v1001 = vmul.f32 %v766, %v990
        %v1002 = vmul.f32 %v771, %v990
        %v1003 = vmul.f32 %v774, %v990
        %v1004 = vmul.f32 %v779, %v990
        %v1005 = vmul.f32 %v782, %v990
        %v1006 = vmul.f32 %v787, %v990
        %v1007 = vmul.f32 %v790, %v990
        %v1008 = vmul.f32 %v795, %v990
        %v1009 = vmul.f32 %v798, %v990
        %v1010 = vmul.f32 %v803, %v990
        %v1011 = vmul.f32 %v806, %v990
        %v1012 = vmul.f32 %v811, %v990
        %v1013 = vmul.f32 %v814, %v990
        %v1014 = vmul.f32 %v819, %v990
        %v1015 = vmul.f32 %v822, %v990
        %v1016 = vmul.f32 %v827, %v990
        %v1017 = vmul.f32 %v830, %v990
        %v1018 = vmul.f32 %v835, %v990
        %v1019 = vmul.f32 %v838, %v990
        %v1020 = vmul.f32 %v843, %v990
        %v1021 = vmul.f32 %v846, %v990
        %v1022 = vmul.f32 %v851, %v990
        %v1023 = vmul.f32 %v854, %v990
        %v1024 = vmul.f32 %v859, %v990
        %v1025 = vmul.f32 %v862, %v990
        %v1026 = vmul.f32 %v867, %v990
        %v1027 = vmul.f32 %v870, %v990
        %v1028 = vmul.f32 %v875, %v990
        %v1029 = vmul.f32 %v878, %v990
        %v1030 = vmul.f32 %v883, %v990
        %v1031 = vmul.f32 %v886, %v990
        %v1032 = vmul.f32 %v891, %v990
        %v1033 = vmul.f32 %v894, %v990
        %v1034 = vmul.f32 %v899, %v990
        %v1035 = vmul.f32 %v902, %v990
        %v1036 = vmul.f32 %v907, %v990
        %v1037 = vmul.f32 %v910, %v990
        %v1038 = vmul.f32 %v915, %v990
        %v1039 = vmul.f32 %v918, %v990
        %v1040 = vmul.f32 %v923, %v990
        %v1041 = vmul.f32 %v926, %v990
        %v1042 = vmul.f32 %v931, %v990
        %v1043 = vmul.f32 %v934, %v990
        %v1044 = vmul.f32 %v939, %v990
        %v1045 = vmul.f32 %v942, %v990
        %v1046 = vmul.f32 %v947, %v990
        %v1047 = vmul.f32 %v950, %v990
        %v1048 = vmul.f32 %v955, %v990
        %v1049 = vmul.f32 %v958, %v990
        %v1050 = vmul.f32 %v963, %v990
        %v1051 = vmul.f32 %v966, %v990
        %v1052 = vmul.f32 %v971, %v990
        %v1053 = vmul.f32 %v974, %v990
        %v1054 = vmul.f32 %v979, %v990
        %v1055 = vmul.f32 %v982, %v990
        %v1056 = vld [vmem:[#allocation9] sm:$0x1]
        %v1058 = vlaneseq
        %v1059 = vshrl.u32 %v1058, 7
        %v1060 = vsub.s32 0, %v1059
        %v1061 = vrot.slane %v1056, %v1060
        %v1063 = vadd.f32 %v992, %v1061
        %v1064 = vadd.f32 %v993, %v1061
        %v1065 = vadd.f32 %v994, %v1061
        %v1066 = vadd.f32 %v995, %v1061
        %v1067 = vadd.f32 %v996, %v1061
        %v1068 = vadd.f32 %v997, %v1061
        %v1069 = vadd.f32 %v998, %v1061
        %v1070 = vadd.f32 %v999, %v1061
        %v1071 = vadd.f32 %v1000, %v1061
        %v1072 = vadd.f32 %v1001, %v1061
        %v1073 = vadd.f32 %v1002, %v1061
        %v1074 = vadd.f32 %v1003, %v1061
        %v1075 = vadd.f32 %v1004, %v1061
        %v1076 = vadd.f32 %v1005, %v1061
        %v1077 = vadd.f32 %v1006, %v1061
        %v1078 = vadd.f32 %v1007, %v1061
        %v1079 = vadd.f32 %v1008, %v1061
        %v1080 = vadd.f32 %v1009, %v1061
        %v1081 = vadd.f32 %v1010, %v1061
        %v1082 = vadd.f32 %v1011, %v1061
        %v1083 = vadd.f32 %v1012, %v1061
        %v1084 = vadd.f32 %v1013, %v1061
        %v1085 = vadd.f32 %v1014, %v1061
        %v1086 = vadd.f32 %v1015, %v1061
        %v1087 = vadd.f32 %v1016, %v1061
        %v1088 = vadd.f32 %v1017, %v1061
        %v1089 = vadd.f32 %v1018, %v1061
        %v1090 = vadd.f32 %v1019, %v1061
        %v1091 = vadd.f32 %v1020, %v1061
        %v1092 = vadd.f32 %v1021, %v1061
        %v1093 = vadd.f32 %v1022, %v1061
        %v1094 = vadd.f32 %v1023, %v1061
        %v1095 = vadd.f32 %v1024, %v1061
        %v1096 = vadd.f32 %v1025, %v1061
        %v1097 = vadd.f32 %v1026, %v1061
        %v1098 = vadd.f32 %v1027, %v1061
        %v1099 = vadd.f32 %v1028, %v1061
        %v1100 = vadd.f32 %v1029, %v1061
        %v1101 = vadd.f32 %v1030, %v1061
        %v1102 = vadd.f32 %v1031, %v1061
        %v1103 = vadd.f32 %v1032, %v1061
        %v1104 = vadd.f32 %v1033, %v1061
        %v1105 = vadd.f32 %v1034, %v1061
        %v1106 = vadd.f32 %v1035, %v1061
        %v1107 = vadd.f32 %v1036, %v1061
        %v1108 = vadd.f32 %v1037, %v1061
        %v1109 = vadd.f32 %v1038, %v1061
        %v1110 = vadd.f32 %v1039, %v1061
        %v1111 = vadd.f32 %v1040, %v1061
        %v1112 = vadd.f32 %v1041, %v1061
        %v1113 = vadd.f32 %v1042, %v1061
        %v1114 = vadd.f32 %v1043, %v1061
        %v1115 = vadd.f32 %v1044, %v1061
        %v1116 = vadd.f32 %v1045, %v1061
        %v1117 = vadd.f32 %v1046, %v1061
        %v1118 = vadd.f32 %v1047, %v1061
        %v1119 = vadd.f32 %v1048, %v1061
        %v1120 = vadd.f32 %v1049, %v1061
        %v1121 = vadd.f32 %v1050, %v1061
        %v1122 = vadd.f32 %v1051, %v1061
        %v1123 = vadd.f32 %v1052, %v1061
        %v1124 = vadd.f32 %v1053, %v1061
        %v1125 = vadd.f32 %v1054, %v1061
        %v1126 = vadd.f32 %v1055, %v1061
        %v1127 = vmax.f32 %v1063, 0.0
        %v1128 = vmax.f32 %v1064, 0.0
        %v1129 = vmax.f32 %v1065, 0.0
        %v1130 = vmax.f32 %v1066, 0.0
        %v1131 = vmax.f32 %v1067, 0.0
        %v1132 = vmax.f32 %v1068, 0.0
        %v1133 = vmax.f32 %v1069, 0.0
        %v1134 = vmax.f32 %v1070, 0.0
        %v1135 = vmax.f32 %v1071, 0.0
        %v1136 = vmax.f32 %v1072, 0.0
        %v1137 = vmax.f32 %v1073, 0.0
        %v1138 = vmax.f32 %v1074, 0.0
        %v1139 = vmax.f32 %v1075, 0.0
        %v1140 = vmax.f32 %v1076, 0.0
        %v1141 = vmax.f32 %v1077, 0.0
        %v1142 = vmax.f32 %v1078, 0.0
        %v1143 = vmax.f32 %v1079, 0.0
        %v1144 = vmax.f32 %v1080, 0.0
        %v1145 = vmax.f32 %v1081, 0.0
        %v1146 = vmax.f32 %v1082, 0.0
        %v1147 = vmax.f32 %v1083, 0.0
        %v1148 = vmax.f32 %v1084, 0.0
        %v1149 = vmax.f32 %v1085, 0.0
        %v1150 = vmax.f32 %v1086, 0.0
        %v1151 = vmax.f32 %v1087, 0.0
        %v1152 = vmax.f32 %v1088, 0.0
        %v1153 = vmax.f32 %v1089, 0.0
        %v1154 = vmax.f32 %v1090, 0.0
        %v1155 = vmax.f32 %v1091, 0.0
        %v1156 = vmax.f32 %v1092, 0.0
        %v1157 = vmax.f32 %v1093, 0.0
        %v1158 = vmax.f32 %v1094, 0.0
        %v1159 = vmax.f32 %v1095, 0.0
        %v1160 = vmax.f32 %v1096, 0.0
        %v1161 = vmax.f32 %v1097, 0.0
        %v1162 = vmax.f32 %v1098, 0.0
        %v1163 = vmax.f32 %v1099, 0.0
        %v1164 = vmax.f32 %v1100, 0.0
        %v1165 = vmax.f32 %v1101, 0.0
        %v1166 = vmax.f32 %v1102, 0.0
        %v1167 = vmax.f32 %v1103, 0.0
        %v1168 = vmax.f32 %v1104, 0.0
        %v1169 = vmax.f32 %v1105, 0.0
        %v1170 = vmax.f32 %v1106, 0.0
        %v1171 = vmax.f32 %v1107, 0.0
        %v1172 = vmax.f32 %v1108, 0.0
        %v1173 = vmax.f32 %v1109, 0.0
        %v1174 = vmax.f32 %v1110, 0.0
        %v1175 = vmax.f32 %v1111, 0.0
        %v1176 = vmax.f32 %v1112, 0.0
        %v1177 = vmax.f32 %v1113, 0.0
        %v1178 = vmax.f32 %v1114, 0.0
        %v1179 = vmax.f32 %v1115, 0.0
        %v1180 = vmax.f32 %v1116, 0.0
        %v1181 = vmax.f32 %v1117, 0.0
        %v1182 = vmax.f32 %v1118, 0.0
        %v1183 = vmax.f32 %v1119, 0.0
        %v1184 = vmax.f32 %v1120, 0.0
        %v1185 = vmax.f32 %v1121, 0.0
        %v1186 = vmax.f32 %v1122, 0.0
        %v1187 = vmax.f32 %v1123, 0.0
        %v1188 = vmax.f32 %v1124, 0.0
        %v1189 = vmax.f32 %v1125, 0.0
        %v1190 = vmax.f32 %v1126, 0.0
        %v1191 = vpack.c.bf16 %v1128, %v1127
        %v1192 = vpack.c.bf16 %v1130, %v1129
        %v1193 = vpack.c.bf16 %v1132, %v1131
        %v1194 = vpack.c.bf16 %v1134, %v1133
        %v1195 = vpack.c.bf16 %v1136, %v1135
        %v1196 = vpack.c.bf16 %v1138, %v1137
        %v1197 = vpack.c.bf16 %v1140, %v1139
        %v1198 = vpack.c.bf16 %v1142, %v1141
        %v1199 = vpack.c.bf16 %v1144, %v1143
        %v1200 = vpack.c.bf16 %v1146, %v1145
        %v1201 = vpack.c.bf16 %v1148, %v1147
        %v1202 = vpack.c.bf16 %v1150, %v1149
        %v1203 = vpack.c.bf16 %v1152, %v1151
        %v1204 = vpack.c.bf16 %v1154, %v1153
        %v1205 = vpack.c.bf16 %v1156, %v1155
        %v1206 = vpack.c.bf16 %v1158, %v1157
        %v1207 = vpack.c.bf16 %v1160, %v1159
        %v1208 = vpack.c.bf16 %v1162, %v1161
        %v1209 = vpack.c.bf16 %v1164, %v1163
        %v1210 = vpack.c.bf16 %v1166, %v1165
        %v1211 = vpack.c.bf16 %v1168, %v1167
        %v1212 = vpack.c.bf16 %v1170, %v1169
        %v1213 = vpack.c.bf16 %v1172, %v1171
        %v1214 = vpack.c.bf16 %v1174, %v1173
        %v1215 = vpack.c.bf16 %v1176, %v1175
        %v1216 = vpack.c.bf16 %v1178, %v1177
        %v1217 = vpack.c.bf16 %v1180, %v1179
        %v1218 = vpack.c.bf16 %v1182, %v1181
        %v1219 = vpack.c.bf16 %v1184, %v1183
        %v1220 = vpack.c.bf16 %v1186, %v1185
        %v1221 = vpack.c.bf16 %v1188, %v1187
        %v1222 = vpack.c.bf16 %v1190, %v1189
        %v1255 = vunpack.c.l.b16 %v1191
        %v1256 = vunpack.c.h.b16 %v1191
        %v1257 = vunpack.c.l.b16 %v1192
        %v1258 = vunpack.c.h.b16 %v1192
        %v1259 = vunpack.c.l.b16 %v1193
        %v1260 = vunpack.c.h.b16 %v1193
        %v1261 = vunpack.c.l.b16 %v1194
        %v1262 = vunpack.c.h.b16 %v1194
        %v1263 = vunpack.c.l.b16 %v1195
        %v1264 = vunpack.c.h.b16 %v1195
        %v1265 = vunpack.c.l.b16 %v1196
        %v1266 = vunpack.c.h.b16 %v1196
        %v1267 = vunpack.c.l.b16 %v1197
        %v1268 = vunpack.c.h.b16 %v1197
        %v1269 = vunpack.c.l.b16 %v1198
        %v1270 = vunpack.c.h.b16 %v1198
        %v1271 = vunpack.c.l.b16 %v1199
        %v1272 = vunpack.c.h.b16 %v1199
        %v1273 = vunpack.c.l.b16 %v1200
        %v1274 = vunpack.c.h.b16 %v1200
        %v1275 = vunpack.c.l.b16 %v1201
        %v1276 = vunpack.c.h.b16 %v1201
        %v1277 = vunpack.c.l.b16 %v1202
        %v1278 = vunpack.c.h.b16 %v1202
        %v1279 = vunpack.c.l.b16 %v1203
        %v1280 = vunpack.c.h.b16 %v1203
        %v1281 = vunpack.c.l.b16 %v1204
        %v1282 = vunpack.c.h.b16 %v1204
        %v1283 = vunpack.c.l.b16 %v1205
        %v1284 = vunpack.c.h.b16 %v1205
        %v1285 = vunpack.c.l.b16 %v1206
        %v1286 = vunpack.c.h.b16 %v1206
        %v1287 = vunpack.c.l.b16 %v1207
        %v1288 = vunpack.c.h.b16 %v1207
        %v1289 = vunpack.c.l.b16 %v1208
        %v1290 = vunpack.c.h.b16 %v1208
        %v1291 = vunpack.c.l.b16 %v1209
        %v1292 = vunpack.c.h.b16 %v1209
        %v1293 = vunpack.c.l.b16 %v1210
        %v1294 = vunpack.c.h.b16 %v1210
        %v1295 = vunpack.c.l.b16 %v1211
        %v1296 = vunpack.c.h.b16 %v1211
        %v1297 = vunpack.c.l.b16 %v1212
        %v1298 = vunpack.c.h.b16 %v1212
        %v1299 = vunpack.c.l.b16 %v1213
        %v1300 = vunpack.c.h.b16 %v1213
        %v1301 = vunpack.c.l.b16 %v1214
        %v1302 = vunpack.c.h.b16 %v1214
        %v1303 = vunpack.c.l.b16 %v1215
        %v1304 = vunpack.c.h.b16 %v1215
        %v1305 = vunpack.c.l.b16 %v1216
        %v1306 = vunpack.c.h.b16 %v1216
        %v1307 = vunpack.c.l.b16 %v1217
        %v1308 = vunpack.c.h.b16 %v1217
        %v1309 = vunpack.c.l.b16 %v1218
        %v1310 = vunpack.c.h.b16 %v1218
        %v1311 = vunpack.c.l.b16 %v1219
        %v1312 = vunpack.c.h.b16 %v1219
        %v1313 = vunpack.c.l.b16 %v1220
        %v1314 = vunpack.c.h.b16 %v1220
        %v1315 = vunpack.c.l.b16 %v1221
        %v1316 = vunpack.c.h.b16 %v1221
        %v1317 = vunpack.c.l.b16 %v1222
        %v1318 = vunpack.c.h.b16 %v1222
        %v1319 = vpack.c.b16 %v1255, %v1255
        %v1320 = vpack.c.b16 %v1256, %v1256
        %v1321 = vpack.c.b16 %v1257, %v1257
        %v1322 = vpack.c.b16 %v1258, %v1258
        %v1323 = vpack.c.b16 %v1259, %v1259
        %v1324 = vpack.c.b16 %v1260, %v1260
        %v1325 = vpack.c.b16 %v1261, %v1261
        %v1326 = vpack.c.b16 %v1262, %v1262
        %v1327 = vpack.c.b16 %v1263, %v1263
        %v1328 = vpack.c.b16 %v1264, %v1264
        %v1329 = vpack.c.b16 %v1265, %v1265
        %v1330 = vpack.c.b16 %v1266, %v1266
        %v1331 = vpack.c.b16 %v1267, %v1267
        %v1332 = vpack.c.b16 %v1268, %v1268
        %v1333 = vpack.c.b16 %v1269, %v1269
        %v1334 = vpack.c.b16 %v1270, %v1270
        %v1335 = vpack.c.b16 %v1271, %v1271
        %v1336 = vpack.c.b16 %v1272, %v1272
        %v1337 = vpack.c.b16 %v1273, %v1273
        %v1338 = vpack.c.b16 %v1274, %v1274
        %v1339 = vpack.c.b16 %v1275, %v1275
        %v1340 = vpack.c.b16 %v1276, %v1276
        %v1341 = vpack.c.b16 %v1277, %v1277
        %v1342 = vpack.c.b16 %v1278, %v1278
        %v1343 = vpack.c.b16 %v1279, %v1279
        %v1344 = vpack.c.b16 %v1280, %v1280
        %v1345 = vpack.c.b16 %v1281, %v1281
        %v1346 = vpack.c.b16 %v1282, %v1282
        %v1347 = vpack.c.b16 %v1283, %v1283
        %v1348 = vpack.c.b16 %v1284, %v1284
        %v1349 = vpack.c.b16 %v1285, %v1285
        %v1350 = vpack.c.b16 %v1286, %v1286
        %v1351 = vpack.c.b16 %v1287, %v1287
        %v1352 = vpack.c.b16 %v1288, %v1288
        %v1353 = vpack.c.b16 %v1289, %v1289
        %v1354 = vpack.c.b16 %v1290, %v1290
        %v1355 = vpack.c.b16 %v1291, %v1291
        %v1356 = vpack.c.b16 %v1292, %v1292
        %v1357 = vpack.c.b16 %v1293, %v1293
        %v1358 = vpack.c.b16 %v1294, %v1294
        %v1359 = vpack.c.b16 %v1295, %v1295
        %v1360 = vpack.c.b16 %v1296, %v1296
        %v1361 = vpack.c.b16 %v1297, %v1297
        %v1362 = vpack.c.b16 %v1298, %v1298
        %v1363 = vpack.c.b16 %v1299, %v1299
        %v1364 = vpack.c.b16 %v1300, %v1300
        %v1365 = vpack.c.b16 %v1301, %v1301
        %v1366 = vpack.c.b16 %v1302, %v1302
        %v1367 = vpack.c.b16 %v1303, %v1303
        %v1368 = vpack.c.b16 %v1304, %v1304
        %v1369 = vpack.c.b16 %v1305, %v1305
        %v1370 = vpack.c.b16 %v1306, %v1306
        %v1371 = vpack.c.b16 %v1307, %v1307
        %v1372 = vpack.c.b16 %v1308, %v1308
        %v1373 = vpack.c.b16 %v1309, %v1309
        %v1374 = vpack.c.b16 %v1310, %v1310
        %v1375 = vpack.c.b16 %v1311, %v1311
        %v1376 = vpack.c.b16 %v1312, %v1312
        %v1377 = vpack.c.b16 %v1313, %v1313
        %v1378 = vpack.c.b16 %v1314, %v1314
        %v1379 = vpack.c.b16 %v1315, %v1315
        %v1380 = vpack.c.b16 %v1316, %v1316
        %v1381 = vpack.c.b16 %v1317, %v1317
        %v1382 = vpack.c.b16 %v1318, %v1318
        %vm1447 = vcmask 519168
        %1448 = vst.msk [vmem:[%s373] sm:$0xf] %vm1447, %v1319
        %1449 = vst.msk [vmem:[%s373 + $0x4] sm:$0xf] %vm1447, %v1320
        %1450 = vst.msk [vmem:[%s373 + $0x8] sm:$0xf] %vm1447, %v1321
        %1451 = vst.msk [vmem:[%s373 + $0xc] sm:$0xf] %vm1447, %v1322
        %1452 = vst.msk [vmem:[%s373 + $0x10] sm:$0xf] %vm1447, %v1323
        %1453 = vst.msk [vmem:[%s373 + $0x14] sm:$0xf] %vm1447, %v1324
        %1454 = vst.msk [vmem:[%s373 + $0x18] sm:$0xf] %vm1447, %v1325
        %1455 = vst.msk [vmem:[%s373 + $0x1c] sm:$0xf] %vm1447, %v1326
        %1456 = vst.msk [vmem:[%s373 + $0x20] sm:$0xf] %vm1447, %v1327
        %1457 = vst.msk [vmem:[%s373 + $0x24] sm:$0xf] %vm1447, %v1328
        %1458 = vst.msk [vmem:[%s373 + $0x28] sm:$0xf] %vm1447, %v1329
        %1459 = vst.msk [vmem:[%s373 + $0x2c] sm:$0xf] %vm1447, %v1330
        %1460 = vst.msk [vmem:[%s373 + $0x30] sm:$0xf] %vm1447, %v1331
        %1461 = vst.msk [vmem:[%s373 + $0x34] sm:$0xf] %vm1447, %v1332
        %1462 = vst.msk [vmem:[%s373 + $0x38] sm:$0xf] %vm1447, %v1333
        %1463 = vst.msk [vmem:[%s373 + $0x3c] sm:$0xf] %vm1447, %v1334
        %1464 = vst.msk [vmem:[%s373 + $0x40] sm:$0xf] %vm1447, %v1335
        %1465 = vst.msk [vmem:[%s373 + $0x44] sm:$0xf] %vm1447, %v1336
        %1466 = vst.msk [vmem:[%s373 + $0x48] sm:$0xf] %vm1447, %v1337
        %1467 = vst.msk [vmem:[%s373 + $0x4c] sm:$0xf] %vm1447, %v1338
        %1468 = vst.msk [vmem:[%s373 + $0x50] sm:$0xf] %vm1447, %v1339
        %1469 = vst.msk [vmem:[%s373 + $0x54] sm:$0xf] %vm1447, %v1340
        %1470 = vst.msk [vmem:[%s373 + $0x58] sm:$0xf] %vm1447, %v1341
        %1471 = vst.msk [vmem:[%s373 + $0x5c] sm:$0xf] %vm1447, %v1342
        %1472 = vst.msk [vmem:[%s373 + $0x60] sm:$0xf] %vm1447, %v1343
        %1473 = vst.msk [vmem:[%s373 + $0x64] sm:$0xf] %vm1447, %v1344
        %1474 = vst.msk [vmem:[%s373 + $0x68] sm:$0xf] %vm1447, %v1345
        %1475 = vst.msk [vmem:[%s373 + $0x6c] sm:$0xf] %vm1447, %v1346
        %1476 = vst.msk [vmem:[%s373 + $0x70] sm:$0xf] %vm1447, %v1347
        %1477 = vst.msk [vmem:[%s373 + $0x74] sm:$0xf] %vm1447, %v1348
        %1478 = vst.msk [vmem:[%s373 + $0x78] sm:$0xf] %vm1447, %v1349
        %1479 = vst.msk [vmem:[%s373 + $0x7c] sm:$0xf] %vm1447, %v1350
        %1480 = vst.msk [vmem:[%s373 + $0x80] sm:$0xf] %vm1447, %v1351
        %1481 = vst.msk [vmem:[%s373 + $0x84] sm:$0xf] %vm1447, %v1352
        %1482 = vst.msk [vmem:[%s373 + $0x88] sm:$0xf] %vm1447, %v1353
        %1483 = vst.msk [vmem:[%s373 + $0x8c] sm:$0xf] %vm1447, %v1354
        %1484 = vst.msk [vmem:[%s373 + $0x90] sm:$0xf] %vm1447, %v1355
        %1485 = vst.msk [vmem:[%s373 + $0x94] sm:$0xf] %vm1447, %v1356
        %1486 = vst.msk [vmem:[%s373 + $0x98] sm:$0xf] %vm1447, %v1357
        %1487 = vst.msk [vmem:[%s373 + $0x9c] sm:$0xf] %vm1447, %v1358
        %1488 = vst.msk [vmem:[%s373 + $0xa0] sm:$0xf] %vm1447, %v1359
        %1489 = vst.msk [vmem:[%s373 + $0xa4] sm:$0xf] %vm1447, %v1360
        %1490 = vst.msk [vmem:[%s373 + $0xa8] sm:$0xf] %vm1447, %v1361
        %1491 = vst.msk [vmem:[%s373 + $0xac] sm:$0xf] %vm1447, %v1362
        %1492 = vst.msk [vmem:[%s373 + $0xb0] sm:$0xf] %vm1447, %v1363
        %1493 = vst.msk [vmem:[%s373 + $0xb4] sm:$0xf] %vm1447, %v1364
        %1494 = vst.msk [vmem:[%s373 + $0xb8] sm:$0xf] %vm1447, %v1365
        %1495 = vst.msk [vmem:[%s373 + $0xbc] sm:$0xf] %vm1447, %v1366
        %1496 = vst.msk [vmem:[%s373 + $0xc0] sm:$0xf] %vm1447, %v1367
        %1497 = vst.msk [vmem:[%s373 + $0xc4] sm:$0xf] %vm1447, %v1368
        %1498 = vst.msk [vmem:[%s373 + $0xc8] sm:$0xf] %vm1447, %v1369
        %1499 = vst.msk [vmem:[%s373 + $0xcc] sm:$0xf] %vm1447, %v1370
        %1500 = vst.msk [vmem:[%s373 + $0xd0] sm:$0xf] %vm1447, %v1371
        %1501 = vst.msk [vmem:[%s373 + $0xd4] sm:$0xf] %vm1447, %v1372
        %1502 = vst.msk [vmem:[%s373 + $0xd8] sm:$0xf] %vm1447, %v1373
        %1503 = vst.msk [vmem:[%s373 + $0xdc] sm:$0xf] %vm1447, %v1374
        %1504 = vst.msk [vmem:[%s373 + $0xe0] sm:$0xf] %vm1447, %v1375
        %1505 = vst.msk [vmem:[%s373 + $0xe4] sm:$0xf] %vm1447, %v1376
        %1506 = vst.msk [vmem:[%s373 + $0xe8] sm:$0xf] %vm1447, %v1377
        %1507 = vst.msk [vmem:[%s373 + $0xec] sm:$0xf] %vm1447, %v1378
        %1508 = vst.msk [vmem:[%s373 + $0xf0] sm:$0xf] %vm1447, %v1379
        %1509 = vst.msk [vmem:[%s373 + $0xf4] sm:$0xf] %vm1447, %v1380
        %1510 = vst.msk [vmem:[%s373 + $0xf8] sm:$0xf] %vm1447, %v1381
        %1511 = vst.msk [vmem:[%s373 + $0xfc] sm:$0xf] %vm1447, %v1382
        %s1512 = smul.u32 64, %s26
        %p1513 = scmp.lt.s32.totalorder %s1512, 3199
        %s1514 = scalar_select %p1513, %s1512, 3199
        %p1515 = scmp.lt.s32.totalorder %s27, 0
        %s1516 = scalar_select %p1515, %s27, 0
        %s1517 = sadd.s32 %s1516, %s1514
        %s1518 = smul.addr %s1517, 4
        %s1519 = scalar_lea.vmem %s6, %s1518
        // Predicated region
        $region65: #{tpu_custom_call.1} parent=43 // pred_check
          %p1520 = pneg %p200
        $region66: #{tpu_custom_call.1} parent=43 // pred_check_branch
          %1522 = sbr.rel (%p1520) target = $region68
        $region67: #{tpu_custom_call.1} parent=43 // pred_region
          %s1523 = smul.u32 64, %s26
        $region68: #{tpu_custom_call.1} parent=43 // pred_fallthru
          _
      $region44: #{tpu_custom_call.1} parent=5 // pred_fallthru
        _
      %p1524 = scmp.le.s32.totalorder 2, %s17
      // Predicated region
      $region69: #{tpu_custom_call.1} parent=5 // pred_check
        %p1525 = pneg %p1524
      $region70: #{tpu_custom_call.1} parent=5 // pred_check_branch
        %1527 = sbr.rel (%p1525) target = $region72
      $region71: #{tpu_custom_call.1} parent=5 // pred_region
        %s1528 = ssub.s32 %s17, 2
        // Predicated region
        $region73: #{tpu_custom_call.1} parent=71 // pred_check
          %p1529 = pneg %p206
        $region74: #{tpu_custom_call.1} parent=71 // pred_check_branch
          %1531 = sbr.rel (%p1529) target = $region76
        $region75: #{tpu_custom_call.1} parent=71 // pred_region
          %s1532 = smul.u32 64, %s28
          %p1533 = scmp.lt.s32.totalorder %s1532, 3199
          %s1534 = scalar_select %p1533, %s1532, 3199
          %p1535 = scmp.lt.s32.totalorder %s29, 0
          %s1536 = scalar_select %p1535, %s29, 0
          %s1537 = sadd.s32 %s1536, %s1534
          %s1538 = smul.addr %s1537, 4
          %s1539 = scalar_lea.vmem %s6, %s1538
        $region76: #{tpu_custom_call.1} parent=71 // pred_fallthru
          _
      $region72: #{tpu_custom_call.1} parent=5 // pred_fallthru
        _
    $region6: #{tpu_custom_call.1} parent=1 // loop_footer
      %s21 = sadd.s32 1, %s17
    $region7: #{tpu_custom_call.1} parent=1 // loop_footer_branch
      %16 = sbr.rel target = $region3
    $region8: #{tpu_custom_call.1} parent=1 // loop_exit
      _
    %1540 = vsyncpa [#allocation3], 1
    %s1541 = scalar_lea.sflag [#allocation3], 1
    %1542 = vsyncpa %s1541, 1
    %1543 = vsyncpa [#allocation5], 1
    %1544 = vsyncpa [#allocation8], 1

</llo_original>
